<compile_context>
chip_gen: v5e
topology: v5e:2x2
jax: 0.10.0
libtpu: 0.0.40
codegen_flags: <defaults>
</compile_context>

<pallas_src>
import functools

import jax
import jax.numpy as jnp
from jax.experimental import pallas as pl
from jax.experimental.pallas import tpu as pltpu

A_LRELU = 0.3
LN_EPS = 1e-5
PREC = jax.lax.Precision.HIGHEST   # reference only


# --------------------------------------------------------------------------- #
# Kernel
# --------------------------------------------------------------------------- #
def resnet1d_kernel(x_ref, lanef_ref, seg_ref, segt_ref, g_ref, beta_ref,
                    w1_ref, w2_ref, w3_ref, w4_ref, ttl_ref, bfc_ref, out_ref,
                    *, bt, f_bins, k1, bps):
    f32, bf16 = jnp.float32, jnp.bfloat16
    x = x_ref[0].astype(f32)                       # (C_in, bt*F), batch in lanes
    c_in, btf = x.shape
    pad = (k1 - 1) // 2
    inv_n = 1.0 / (c_in * f_bins)

    def leaky(v):
        return jnp.where(v > 0, v, A_LRELU * v)

    def mm(w, s):
        # Channel-mix matmul: bf16 operands (native MXU path), f32 accumulation.
        return jnp.dot(w, s.astype(bf16), preferred_element_type=f32)

    def seg_dot(a, ind):
        # ~f32-accurate (a @ ind) for a 0/1 indicator matrix `ind` (exact in
        # bf16): two default-precision MXU passes, hi part + rounding residual.
        a_hi = a.astype(bf16)
        a_lo = (a - a_hi.astype(f32)).astype(bf16)
        return (jnp.dot(a_hi, ind, preferred_element_type=f32)
                + jnp.dot(a_lo, ind, preferred_element_type=f32))

    def shift_left(v, d):
        # out[:, j] = v[:, j + d]; lanes shifted in from outside are zero.
        if d == 0:
            return v
        rows = v.shape[0]
        z = jnp.zeros((rows, abs(d)), v.dtype)
        if d > 0:
            return jnp.concatenate([v[:, d:], z], axis=1)
        return jnp.concatenate([z, v[:, :btf + d]], axis=1)

    ones_row = jnp.ones((1, btf), f32)
    lane_f = lanef_ref[...]                        # (1, bt*F) freq index per lane

    # ---- LayerNorm over (channels, freq) per batch element (centered form) ----
    if bt == 1:
        mu = jnp.mean(x, keepdims=True)                              # (1, 1)
        xc = x - mu
        var = jnp.mean(xc * xc, keepdims=True)
        xn = xc * jax.lax.rsqrt(var + LN_EPS) * g_ref[...] + beta_ref[...]
    else:
        seg = seg_ref[...]                                           # (bt*F, bt)
        segt = segt_ref[...]                                         # (bt, bt*F)
        colsum = jnp.sum(x, axis=0, keepdims=True)                   # (1, bt*F)
        mu_b = seg_dot(colsum, seg) * inv_n                          # (1, bt)
        mu = seg_dot(mu_b, segt)                                     # (1, bt*F)
        xc = x - mu
        colsq = jnp.sum(xc * xc, axis=0, keepdims=True)
        var_b = seg_dot(colsq, seg) * inv_n                          # (1, bt)
        inv_b = jax.lax.rsqrt(var_b + LN_EPS)
        inv = seg_dot(inv_b, segt)                                   # (1, bt*F)
        xn = xc * inv * g_ref[...] + beta_ref[...]

    # ---- conv1 (k=15, pad=7): zero-fill lane shifts + batch-edge mask ->
    #      one (C1, k1*C_in+1) @ (k1*C_in+1, bt*F) matmul (bias via ones-row) ----
    pieces = []
    for t in range(k1):
        d = t - pad
        piece = shift_left(xn, d)
        if bt > 1 and d != 0:
            # keep only taps whose source freq index stays inside this batch's F
            valid = (lane_f >= float(-d)) & (lane_f <= float(f_bins - 1 - d))
            piece = jnp.where(valid, piece, 0.0)
        pieces.append(piece)
    slab1 = jnp.concatenate(pieces + [ones_row], axis=0)             # (k1*C_in+1, bt*F)
    h1 = leaky(mm(w1_ref[...], slab1))                               # (C1, bt*F)

    # ---- conv2 (kernel == stride == bps) at every lane position; the stride
    #      subsample is deferred into the fc operand (unused positions hold
    #      garbage that is multiplied by zero rows there). ----------------------
    p2 = [h1] + [shift_left(h1, t) for t in range(1, bps)]
    slab2 = jnp.concatenate(p2 + [ones_row], axis=0)                 # (bps*C1+1, bt*F)
    h2 = leaky(mm(w2_ref[...], slab2))                               # (C2, bt*F)

    # ---- conv3 / conv4 first stage: 1x1 channel mixes (bias via ones-row) -----
    h3 = leaky(mm(w3_ref[...], jnp.concatenate([h2, ones_row], axis=0)))   # (C3, bt*F)
    h4 = leaky(mm(w4_ref[...], jnp.concatenate([h3, ones_row], axis=0)))   # (1, bt*F)

    # ---- subsample + last 1x1 conv + flatten + Toeplitz fc, per batch ---------
    #      out[o, b] = sum_f ttl[o, b*F + f] * h4[0, b*F + f] + bfc[o]
    p = ttl_ref[...] * h4                                            # (out_dim, bt*F) f32
    if bt == 1:
        out_t = jnp.sum(p, axis=1, keepdims=True) + bfc_ref[...]     # (out_dim, 1)
    else:
        out_t = seg_dot(p, seg) + bfc_ref[...]                       # (out_dim, bt)
    out_ref[0] = out_t.astype(out_ref.dtype)


# --------------------------------------------------------------------------- #
# Wrapper-side operand preparation (pure layout plumbing, all free in XLA)
# --------------------------------------------------------------------------- #
def build_kernel_operands(raw, bt):
    f32, bf16 = jnp.float32, jnp.bfloat16
    c1, c_in, k1 = raw["w1"].shape
    c2 = raw["w2"].shape[0]
    bps = raw["bps"]
    f_bins = raw["ln_g"].shape[1]
    fo = raw["n_bins_out"]
    out_dim = raw["output_dim"]
    assert raw["w4a"].shape[0] == 1 and raw["w4b"].shape[0] == 1

    # freq index of every lane (batch folded into lanes, batch-major)
    lane_f = jnp.tile(jnp.arange(f_bins, dtype=f32), (bt,))[None, :]          # (1, bt*F)

    # per-batch segment indicator matrices (0/1 -> exact in bf16)
    seg = jnp.kron(jnp.eye(bt, dtype=f32), jnp.ones((f_bins, 1), f32)).astype(bf16)   # (bt*F, bt)
    segt = jnp.kron(jnp.eye(bt, dtype=f32), jnp.ones((1, f_bins), f32)).astype(bf16)  # (bt, bt*F)

    # LayerNorm affine, tiled across the batch-in-lanes layout
    g_t = jnp.tile(raw["ln_g"], (1, bt)).astype(f32)
    b_t = jnp.tile(raw["ln_b"], (1, bt)).astype(f32)

    # conv weights flattened to the in-kernel slab row order; bias folded as the
    # last column (matches the appended ones-row on each slab).
    w1f = jnp.transpose(raw["w1"], (0, 2, 1)).reshape(c1, k1 * c_in)
    w1aug = jnp.concatenate([w1f, raw["b1"][:, None]], axis=1).astype(bf16)
    w2f = jnp.transpose(raw["w2"], (0, 2, 1)).reshape(c2, bps * c1)
    w2aug = jnp.concatenate([w2f, raw["b2"][:, None]], axis=1).astype(bf16)
    w3aug = jnp.concatenate([raw["w3"][:, :, 0], raw["b3"][:, None]], axis=1).astype(bf16)
    w4aug = jnp.concatenate([raw["w4a"][:, :, 0], raw["b4a"][:, None]], axis=1).astype(bf16)

    # Toeplitz fc folded with the stride-bps subsample and the final 1x1 conv
    # (w4b, b4b), laid out per-lane so the kernel does (ttl * h4) @ seg.
    toe_idx = (jnp.arange(fo)[:, None]
               - jnp.arange(out_dim)[None, :] + out_dim - 1)
    tfc = raw["w_fc"][0, 0][toe_idx]                                          # (Fo, out_dim)
    w4b_s = raw["w4b"][0, 0, 0]
    b4b_s = raw["b4b"][0]
    tblock = jnp.zeros((f_bins, out_dim), f32).at[bps * jnp.arange(fo), :].set(w4b_s * tfc)
    ttl = jnp.tile(tblock.T, (1, bt)).astype(f32)                             # (out_dim, bt*F)
    bfc = (b4b_s * jnp.sum(tfc, axis=0))[:, None].astype(f32)                 # (out_dim, 1)

    return (lane_f, seg, segt, g_t, b_t, w1aug, w2aug, w3aug, w4aug, ttl, bfc)


def _default_batch_tile(B):
    # v5e / v6e: single TensorCore -> one wide grid step (the grid is a serial
    # loop; extra steps are pure overhead).  v7x: 2 TCs -> two parallel steps
    # once there is enough batch to split.  Keep bt a multiple of 8 so bt*F
    # (F = 48) lands on 128-lane-aligned slabs.
    try:
        kind = jax.devices()[0].device_kind.lower()
    except Exception:
        kind = ""
    two_core = "v7" in kind
    n_steps = 2 if (two_core and B >= 16) else 1
    bt = -(-B // n_steps)
    if B >= 8:
        bt = -(-bt // 8) * 8
    return max(1, min(bt, 128))      # cap so per-step VMEM stays small


def resnet1d_forward(x, raw, batch_tile=None):
    """x: (B, C_in, F) float32; returns (B, output_dim) float32."""
    B, c_in, f_bins = x.shape
    out_dim = raw["output_dim"]

    bt = int(batch_tile) if batch_tile is not None else _default_batch_tile(B)
    grid_b = pl.cdiv(B, bt)
    b_pad = grid_b * bt
    if b_pad != B:
        x = jnp.concatenate([x, jnp.zeros((b_pad - B, c_in, f_bins), x.dtype)], axis=0)

    # (B_pad, C, F) -> (G, C, bt*F): batch folded into the lane axis per block.
    xb = (x.reshape(grid_b, bt, c_in, f_bins)
           .transpose(0, 2, 1, 3)
           .reshape(grid_b, c_in, bt * f_bins))

    ops = build_kernel_operands(raw, bt)

    def full_spec(a):
        nd = a.ndim
        return pl.BlockSpec(a.shape, lambda *_: (0,) * nd)

    kern = functools.partial(resnet1d_kernel, bt=bt, f_bins=f_bins,
                             k1=int(raw["w1"].shape[2]), bps=int(raw["bps"]))

    grid_spec = pltpu.PrefetchScalarGridSpec(
        num_scalar_prefetch=0,
        grid=(grid_b,),
        in_specs=[pl.BlockSpec((1, c_in, bt * f_bins), lambda g: (g, 0, 0))]
                 + [full_spec(a) for a in ops],
        out_specs=pl.BlockSpec((1, out_dim, bt), lambda g: (g, 0, 0)),
    )
    out_t = pl.pallas_call(
        kern,
        out_shape=jax.ShapeDtypeStruct((grid_b, out_dim, bt), jnp.float32),
        grid_spec=grid_spec,
        compiler_params=pltpu.CompilerParams(dimension_semantics=("parallel",)),
    )(xb, *ops)

    out = out_t.transpose(0, 2, 1).reshape(b_pad, out_dim)
    return out[:B]


# --------------------------------------------------------------------------- #
# Parameters + pure-JAX reference (mirrors the PyTorch forward, eval mode)
# --------------------------------------------------------------------------- #
def init_params(key, *, n_chan_input=4, n_chan_layers=(8, 8, 4, 1, 1),
                n_bins_in=48, n_bins_out=16, output_dim=32):
    C_in = n_chan_input
    C1, C2, C3, C4, C5 = n_chan_layers
    F = n_bins_in
    bps = F // n_bins_out                         # bins_per_semitone
    last_k = F // bps + 1 - n_bins_out            # == 1 for this config
    assert last_k == 1
    pre_fc_dim = n_bins_out * C5

    ks = jax.random.split(key, 13)
    rnd = lambda k, s, scale=0.1: scale * jax.random.normal(k, s, jnp.float32)

    raw = dict(
        ln_g=1.0 + rnd(ks[0], (C_in, F)),
        ln_b=rnd(ks[1], (C_in, F)),
        w1=rnd(ks[2], (C1, C_in, 15)), b1=rnd(ks[3], (C1,)),
        w2=rnd(ks[4], (C2, C1, bps)),  b2=rnd(ks[5], (C2,)),
        w3=rnd(ks[6], (C3, C2, 1)),    b3=rnd(ks[7], (C3,)),
        w4a=rnd(ks[8], (C4, C3, 1)),   b4a=rnd(ks[9], (C4,)),
        w4b=rnd(ks[10], (C5, C4, last_k)), b4b=rnd(ks[11], (C5,)),
        w_fc=rnd(ks[12], (1, 1, pre_fc_dim + output_dim - 1)),
        bps=bps, n_bins_out=n_bins_out, output_dim=output_dim,
    )
    return raw


def reference_forward(x, raw):
    def conv1d(v, w, b, stride=1, pad=0):
        y = jax.lax.conv_general_dilated(
            v, w, window_strides=(stride,), padding=[(pad, pad)],
            dimension_numbers=("NCH", "OIH", "NCH"), precision=PREC)
        return y + b[None, :, None]

    def leaky(v):
        return jnp.where(v > 0, v, A_LRELU * v)

    mu = x.mean(axis=(1, 2), keepdims=True)
    var = ((x - mu) ** 2).mean(axis=(1, 2), keepdims=True)
    xn = (x - mu) / jnp.sqrt(var + LN_EPS) * raw["ln_g"][None] + raw["ln_b"][None]

    h = leaky(conv1d(xn, raw["w1"], raw["b1"], 1, 7))
    h = leaky(conv1d(h, raw["w2"], raw["b2"], raw["bps"], 0))
    h = leaky(conv1d(h, raw["w3"], raw["b3"], 1, 0))
    h = leaky(conv1d(h, raw["w4a"], raw["b4a"], 1, 0))
    h = conv1d(h, raw["w4b"], raw["b4b"], 1, 0)
    flat = h.reshape(h.shape[0], -1)
    p = raw["output_dim"] - 1
    y = jax.lax.conv_general_dilated(
        flat[:, None, :], raw["w_fc"], (1,), [(p, p)],
        dimension_numbers=("NCH", "OIH", "NCH"), precision=PREC)[:, 0, :]
    return y   # final_norm = Identity


if __name__ == "__main__":
    key = jax.random.PRNGKey(0)
    k_x, k_p = jax.random.split(key)

    # Small config consistent with the module: n_chan_input=4, n_bins_in=48,
    # n_bins_out=16 (=> bins_per_semitone=3, last_kernel_size=1), output_dim=32.
    B, C_in, F = 8, 4, 48
    x = jax.random.normal(k_x, (B, C_in, F), jnp.float32)
    raw = init_params(k_p, n_chan_input=C_in, n_bins_in=F,
                      n_bins_out=16, output_dim=32)

    out = resnet1d_forward(x, raw)
    out = jax.block_until_ready(out)

    ref = reference_forward(x, raw)
    assert out.shape == (B, 32), out.shape
    assert jnp.allclose(out, ref, atol=5e-3, rtol=5e-3), \
        float(jnp.max(jnp.abs(out - ref)))
    print("KERNEL_OK")
</pallas_src>

<mosaic_0001>
module attributes {stable_mosaic.version = 11 : i64} {
  func.func @resnet1d_kernel(%arg0: i32, %arg1: memref<1x4x384xf32, #tpu.memory_space<vmem>>, %arg2: memref<1x384xf32, #tpu.memory_space<vmem>>, %arg3: memref<384x8xbf16, #tpu.memory_space<vmem>>, %arg4: memref<8x384xbf16, #tpu.memory_space<vmem>>, %arg5: memref<4x384xf32, #tpu.memory_space<vmem>>, %arg6: memref<4x384xf32, #tpu.memory_space<vmem>>, %arg7: memref<8x61xbf16, #tpu.memory_space<vmem>>, %arg8: memref<8x25xbf16, #tpu.memory_space<vmem>>, %arg9: memref<4x9xbf16, #tpu.memory_space<vmem>>, %arg10: memref<1x5xbf16, #tpu.memory_space<vmem>>, %arg11: memref<32x384xf32, #tpu.memory_space<vmem>>, %arg12: memref<32x1xf32, #tpu.memory_space<vmem>>, %arg13: memref<1x32x8xf32, #tpu.memory_space<vmem>>) attributes {dimension_semantics = [#tpu.dimension_semantics<parallel>], iteration_bounds = array<i64: 1>, scalar_prefetch = 0 : i64, scratch_operands = 0 : i64, tpu.core_type = #tpu.core_type<tc>, window_params = [{transform_indices = @transform_0, window_bounds = array<i64: 1, 4, 384>}, {pipeline_mode = #tpu.pipeline_mode<synchronous>, transform_indices = @transform_1, window_bounds = array<i64: 1, 384>}, {pipeline_mode = #tpu.pipeline_mode<synchronous>, transform_indices = @transform_2, window_bounds = array<i64: 384, 8>}, {pipeline_mode = #tpu.pipeline_mode<synchronous>, transform_indices = @transform_3, window_bounds = array<i64: 8, 384>}, {pipeline_mode = #tpu.pipeline_mode<synchronous>, transform_indices = @transform_4, window_bounds = array<i64: 4, 384>}, {pipeline_mode = #tpu.pipeline_mode<synchronous>, transform_indices = @transform_5, window_bounds = array<i64: 4, 384>}, {pipeline_mode = #tpu.pipeline_mode<synchronous>, transform_indices = @transform_6, window_bounds = array<i64: 8, 61>}, {pipeline_mode = #tpu.pipeline_mode<synchronous>, transform_indices = @transform_7, window_bounds = array<i64: 8, 25>}, {pipeline_mode = #tpu.pipeline_mode<synchronous>, transform_indices = @transform_8, window_bounds = array<i64: 4, 9>}, {pipeline_mode = #tpu.pipeline_mode<synchronous>, transform_indices = @transform_9, window_bounds = array<i64: 1, 5>}, {pipeline_mode = #tpu.pipeline_mode<synchronous>, transform_indices = @transform_10, window_bounds = array<i64: 32, 384>}, {pipeline_mode = #tpu.pipeline_mode<synchronous>, transform_indices = @transform_11, window_bounds = array<i64: 32, 1>}, {transform_indices = @transform_12, window_bounds = array<i64: 1, 32, 8>}]} {
    %c0 = arith.constant 0 : index
    %c0_0 = arith.constant 0 : index
    %c0_1 = arith.constant 0 : index
    %0 = vector.load %arg1[%c0, %c0_0, %c0_1] : memref<1x4x384xf32, #tpu.memory_space<vmem>>, vector<1x4x384xf32>
    %1 = vector.shape_cast %0 : vector<1x4x384xf32> to vector<4x384xf32>
    %cst = arith.constant 1.000000e+00 : f32
    %2 = vector.broadcast %cst : f32 to vector<1x384xf32>
    %c0_2 = arith.constant 0 : index
    %c0_3 = arith.constant 0 : index
    %3 = vector.load %arg2[%c0_2, %c0_3] : memref<1x384xf32, #tpu.memory_space<vmem>>, vector<1x384xf32>
    %c0_4 = arith.constant 0 : index
    %c0_5 = arith.constant 0 : index
    %4 = vector.load %arg3[%c0_4, %c0_5] : memref<384x8xbf16, #tpu.memory_space<vmem>>, vector<384x8xbf16>
    %c0_6 = arith.constant 0 : index
    %c0_7 = arith.constant 0 : index
    %5 = vector.load %arg4[%c0_6, %c0_7] : memref<8x384xbf16, #tpu.memory_space<vmem>>, vector<8x384xbf16>
    %cst_8 = arith.constant dense<0.000000e+00> : vector<384xf32>
    %6 = vector.multi_reduction <add>, %1, %cst_8 [0] : vector<4x384xf32> to vector<384xf32>
    %7 = vector.shape_cast %6 : vector<384xf32> to vector<1x384xf32>
    %8 = arith.truncf %7 : vector<1x384xf32> to vector<1x384xbf16>
    %9 = arith.extf %8 : vector<1x384xbf16> to vector<1x384xf32>
    %10 = arith.subf %7, %9 : vector<1x384xf32>
    %11 = arith.truncf %10 : vector<1x384xf32> to vector<1x384xbf16>
    %cst_9 = arith.constant dense<0.000000e+00> : vector<1x8xf32>
    %12 = tpu.matmul %8, %4, %cst_9 {dimension_numbers = #tpu.dot_dimension_numbers<[1], [0], [0], [1], [0, 0, 1, 1], [], []>} : vector<1x384xbf16>, vector<384x8xbf16>, vector<1x8xf32> -> vector<1x8xf32>
    %cst_10 = arith.constant dense<0.000000e+00> : vector<1x8xf32>
    %13 = tpu.matmul %11, %4, %cst_10 {dimension_numbers = #tpu.dot_dimension_numbers<[1], [0], [0], [1], [0, 0, 1, 1], [], []>} : vector<1x384xbf16>, vector<384x8xbf16>, vector<1x8xf32> -> vector<1x8xf32>
    %14 = arith.addf %12, %13 : vector<1x8xf32>
    %cst_11 = arith.constant 0.00520833349 : f32
    %15 = vector.broadcast %cst_11 : f32 to vector<1x8xf32>
    %16 = arith.mulf %14, %15 : vector<1x8xf32>
    %17 = arith.truncf %16 : vector<1x8xf32> to vector<1x8xbf16>
    %18 = arith.extf %17 : vector<1x8xbf16> to vector<1x8xf32>
    %19 = arith.subf %16, %18 : vector<1x8xf32>
    %20 = arith.truncf %19 : vector<1x8xf32> to vector<1x8xbf16>
    %cst_12 = arith.constant dense<0.000000e+00> : vector<1x384xf32>
    %21 = tpu.matmul %17, %5, %cst_12 {dimension_numbers = #tpu.dot_dimension_numbers<[1], [0], [0], [1], [0, 0, 1, 1], [], []>} : vector<1x8xbf16>, vector<8x384xbf16>, vector<1x384xf32> -> vector<1x384xf32>
    %cst_13 = arith.constant dense<0.000000e+00> : vector<1x384xf32>
    %22 = tpu.matmul %20, %5, %cst_13 {dimension_numbers = #tpu.dot_dimension_numbers<[1], [0], [0], [1], [0, 0, 1, 1], [], []>} : vector<1x8xbf16>, vector<8x384xbf16>, vector<1x384xf32> -> vector<1x384xf32>
    %23 = arith.addf %21, %22 : vector<1x384xf32>
    %24 = vector.broadcast %23 : vector<1x384xf32> to vector<4x384xf32>
    %25 = arith.subf %1, %24 : vector<4x384xf32>
    %26 = arith.mulf %25, %25 : vector<4x384xf32>
    %cst_14 = arith.constant dense<0.000000e+00> : vector<384xf32>
    %27 = vector.multi_reduction <add>, %26, %cst_14 [0] : vector<4x384xf32> to vector<384xf32>
    %28 = vector.shape_cast %27 : vector<384xf32> to vector<1x384xf32>
    %29 = arith.truncf %28 : vector<1x384xf32> to vector<1x384xbf16>
    %30 = arith.extf %29 : vector<1x384xbf16> to vector<1x384xf32>
    %31 = arith.subf %28, %30 : vector<1x384xf32>
    %32 = arith.truncf %31 : vector<1x384xf32> to vector<1x384xbf16>
    %cst_15 = arith.constant dense<0.000000e+00> : vector<1x8xf32>
    %33 = tpu.matmul %29, %4, %cst_15 {dimension_numbers = #tpu.dot_dimension_numbers<[1], [0], [0], [1], [0, 0, 1, 1], [], []>} : vector<1x384xbf16>, vector<384x8xbf16>, vector<1x8xf32> -> vector<1x8xf32>
    %cst_16 = arith.constant dense<0.000000e+00> : vector<1x8xf32>
    %34 = tpu.matmul %32, %4, %cst_16 {dimension_numbers = #tpu.dot_dimension_numbers<[1], [0], [0], [1], [0, 0, 1, 1], [], []>} : vector<1x384xbf16>, vector<384x8xbf16>, vector<1x8xf32> -> vector<1x8xf32>
    %35 = arith.addf %33, %34 : vector<1x8xf32>
    %cst_17 = arith.constant 0.00520833349 : f32
    %36 = vector.broadcast %cst_17 : f32 to vector<1x8xf32>
    %37 = arith.mulf %35, %36 : vector<1x8xf32>
    %cst_18 = arith.constant 9.99999974E-6 : f32
    %38 = vector.broadcast %cst_18 : f32 to vector<1x8xf32>
    %39 = arith.addf %37, %38 : vector<1x8xf32>
    %40 = math.rsqrt %39 : vector<1x8xf32>
    %41 = arith.truncf %40 : vector<1x8xf32> to vector<1x8xbf16>
    %42 = arith.extf %41 : vector<1x8xbf16> to vector<1x8xf32>
    %43 = arith.subf %40, %42 : vector<1x8xf32>
    %44 = arith.truncf %43 : vector<1x8xf32> to vector<1x8xbf16>
    %cst_19 = arith.constant dense<0.000000e+00> : vector<1x384xf32>
    %45 = tpu.matmul %41, %5, %cst_19 {dimension_numbers = #tpu.dot_dimension_numbers<[1], [0], [0], [1], [0, 0, 1, 1], [], []>} : vector<1x8xbf16>, vector<8x384xbf16>, vector<1x384xf32> -> vector<1x384xf32>
    %cst_20 = arith.constant dense<0.000000e+00> : vector<1x384xf32>
    %46 = tpu.matmul %44, %5, %cst_20 {dimension_numbers = #tpu.dot_dimension_numbers<[1], [0], [0], [1], [0, 0, 1, 1], [], []>} : vector<1x8xbf16>, vector<8x384xbf16>, vector<1x384xf32> -> vector<1x384xf32>
    %47 = arith.addf %45, %46 : vector<1x384xf32>
    %48 = vector.broadcast %47 : vector<1x384xf32> to vector<4x384xf32>
    %49 = arith.mulf %25, %48 : vector<4x384xf32>
    %c0_21 = arith.constant 0 : index
    %c0_22 = arith.constant 0 : index
    %50 = vector.load %arg5[%c0_21, %c0_22] : memref<4x384xf32, #tpu.memory_space<vmem>>, vector<4x384xf32>
    %51 = arith.mulf %49, %50 : vector<4x384xf32>
    %c0_23 = arith.constant 0 : index
    %c0_24 = arith.constant 0 : index
    %52 = vector.load %arg6[%c0_23, %c0_24] : memref<4x384xf32, #tpu.memory_space<vmem>>, vector<4x384xf32>
    %53 = arith.addf %51, %52 : vector<4x384xf32>
    %cst_25 = arith.constant 0.000000e+00 : f32
    %54 = vector.broadcast %cst_25 : f32 to vector<4x7xf32>
    %55 = vector.extract_strided_slice %53 {offsets = [0, 0], sizes = [4, 377], strides = [1, 1]} : vector<4x384xf32> to vector<4x377xf32>
    %56 = tpu.concatenate %54, %55 in 1 : vector<4x7xf32>, vector<4x377xf32> -> vector<4x384xf32>
    %cst_26 = arith.constant 7.000000e+00 : f32
    %57 = vector.broadcast %cst_26 : f32 to vector<1x384xf32>
    %58 = arith.cmpf oge, %3, %57 : vector<1x384xf32>
    %cst_27 = arith.constant 5.400000e+01 : f32
    %59 = vector.broadcast %cst_27 : f32 to vector<1x384xf32>
    %60 = arith.cmpf ole, %3, %59 : vector<1x384xf32>
    %61 = arith.andi %58, %60 : vector<1x384xi1>
    %cst_28 = arith.constant 0.000000e+00 : f32
    %62 = vector.shape_cast %61 : vector<1x384xi1> to vector<1x384xi1>
    %63 = vector.broadcast %62 : vector<1x384xi1> to vector<4x384xi1>
    %64 = vector.broadcast %cst_28 : f32 to vector<4x384xf32>
    %65 = arith.select %63, %56, %64 : vector<4x384xi1>, vector<4x384xf32>
    %cst_29 = arith.constant 0.000000e+00 : f32
    %66 = vector.broadcast %cst_29 : f32 to vector<4x6xf32>
    %67 = vector.extract_strided_slice %53 {offsets = [0, 0], sizes = [4, 378], strides = [1, 1]} : vector<4x384xf32> to vector<4x378xf32>
    %68 = tpu.concatenate %66, %67 in 1 : vector<4x6xf32>, vector<4x378xf32> -> vector<4x384xf32>
    %cst_30 = arith.constant 6.000000e+00 : f32
    %69 = vector.broadcast %cst_30 : f32 to vector<1x384xf32>
    %70 = arith.cmpf oge, %3, %69 : vector<1x384xf32>
    %cst_31 = arith.constant 5.300000e+01 : f32
    %71 = vector.broadcast %cst_31 : f32 to vector<1x384xf32>
    %72 = arith.cmpf ole, %3, %71 : vector<1x384xf32>
    %73 = arith.andi %70, %72 : vector<1x384xi1>
    %cst_32 = arith.constant 0.000000e+00 : f32
    %74 = vector.shape_cast %73 : vector<1x384xi1> to vector<1x384xi1>
    %75 = vector.broadcast %74 : vector<1x384xi1> to vector<4x384xi1>
    %76 = vector.broadcast %cst_32 : f32 to vector<4x384xf32>
    %77 = arith.select %75, %68, %76 : vector<4x384xi1>, vector<4x384xf32>
    %cst_33 = arith.constant 0.000000e+00 : f32
    %78 = vector.broadcast %cst_33 : f32 to vector<4x5xf32>
    %79 = vector.extract_strided_slice %53 {offsets = [0, 0], sizes = [4, 379], strides = [1, 1]} : vector<4x384xf32> to vector<4x379xf32>
    %80 = tpu.concatenate %78, %79 in 1 : vector<4x5xf32>, vector<4x379xf32> -> vector<4x384xf32>
    %cst_34 = arith.constant 5.000000e+00 : f32
    %81 = vector.broadcast %cst_34 : f32 to vector<1x384xf32>
    %82 = arith.cmpf oge, %3, %81 : vector<1x384xf32>
    %cst_35 = arith.constant 5.200000e+01 : f32
    %83 = vector.broadcast %cst_35 : f32 to vector<1x384xf32>
    %84 = arith.cmpf ole, %3, %83 : vector<1x384xf32>
    %85 = arith.andi %82, %84 : vector<1x384xi1>
    %cst_36 = arith.constant 0.000000e+00 : f32
    %86 = vector.shape_cast %85 : vector<1x384xi1> to vector<1x384xi1>
    %87 = vector.broadcast %86 : vector<1x384xi1> to vector<4x384xi1>
    %88 = vector.broadcast %cst_36 : f32 to vector<4x384xf32>
    %89 = arith.select %87, %80, %88 : vector<4x384xi1>, vector<4x384xf32>
    %cst_37 = arith.constant 0.000000e+00 : f32
    %90 = vector.broadcast %cst_37 : f32 to vector<4x4xf32>
    %91 = vector.extract_strided_slice %53 {offsets = [0, 0], sizes = [4, 380], strides = [1, 1]} : vector<4x384xf32> to vector<4x380xf32>
    %92 = tpu.concatenate %90, %91 in 1 : vector<4x4xf32>, vector<4x380xf32> -> vector<4x384xf32>
    %cst_38 = arith.constant 4.000000e+00 : f32
    %93 = vector.broadcast %cst_38 : f32 to vector<1x384xf32>
    %94 = arith.cmpf oge, %3, %93 : vector<1x384xf32>
    %cst_39 = arith.constant 5.100000e+01 : f32
    %95 = vector.broadcast %cst_39 : f32 to vector<1x384xf32>
    %96 = arith.cmpf ole, %3, %95 : vector<1x384xf32>
    %97 = arith.andi %94, %96 : vector<1x384xi1>
    %cst_40 = arith.constant 0.000000e+00 : f32
    %98 = vector.shape_cast %97 : vector<1x384xi1> to vector<1x384xi1>
    %99 = vector.broadcast %98 : vector<1x384xi1> to vector<4x384xi1>
    %100 = vector.broadcast %cst_40 : f32 to vector<4x384xf32>
    %101 = arith.select %99, %92, %100 : vector<4x384xi1>, vector<4x384xf32>
    %cst_41 = arith.constant 0.000000e+00 : f32
    %102 = vector.broadcast %cst_41 : f32 to vector<4x3xf32>
    %103 = vector.extract_strided_slice %53 {offsets = [0, 0], sizes = [4, 381], strides = [1, 1]} : vector<4x384xf32> to vector<4x381xf32>
    %104 = tpu.concatenate %102, %103 in 1 : vector<4x3xf32>, vector<4x381xf32> -> vector<4x384xf32>
    %cst_42 = arith.constant 3.000000e+00 : f32
    %105 = vector.broadcast %cst_42 : f32 to vector<1x384xf32>
    %106 = arith.cmpf oge, %3, %105 : vector<1x384xf32>
    %cst_43 = arith.constant 5.000000e+01 : f32
    %107 = vector.broadcast %cst_43 : f32 to vector<1x384xf32>
    %108 = arith.cmpf ole, %3, %107 : vector<1x384xf32>
    %109 = arith.andi %106, %108 : vector<1x384xi1>
    %cst_44 = arith.constant 0.000000e+00 : f32
    %110 = vector.shape_cast %109 : vector<1x384xi1> to vector<1x384xi1>
    %111 = vector.broadcast %110 : vector<1x384xi1> to vector<4x384xi1>
    %112 = vector.broadcast %cst_44 : f32 to vector<4x384xf32>
    %113 = arith.select %111, %104, %112 : vector<4x384xi1>, vector<4x384xf32>
    %cst_45 = arith.constant 0.000000e+00 : f32
    %114 = vector.broadcast %cst_45 : f32 to vector<4x2xf32>
    %115 = vector.extract_strided_slice %53 {offsets = [0, 0], sizes = [4, 382], strides = [1, 1]} : vector<4x384xf32> to vector<4x382xf32>
    %116 = tpu.concatenate %114, %115 in 1 : vector<4x2xf32>, vector<4x382xf32> -> vector<4x384xf32>
    %cst_46 = arith.constant 2.000000e+00 : f32
    %117 = vector.broadcast %cst_46 : f32 to vector<1x384xf32>
    %118 = arith.cmpf oge, %3, %117 : vector<1x384xf32>
    %cst_47 = arith.constant 4.900000e+01 : f32
    %119 = vector.broadcast %cst_47 : f32 to vector<1x384xf32>
    %120 = arith.cmpf ole, %3, %119 : vector<1x384xf32>
    %121 = arith.andi %118, %120 : vector<1x384xi1>
    %cst_48 = arith.constant 0.000000e+00 : f32
    %122 = vector.shape_cast %121 : vector<1x384xi1> to vector<1x384xi1>
    %123 = vector.broadcast %122 : vector<1x384xi1> to vector<4x384xi1>
    %124 = vector.broadcast %cst_48 : f32 to vector<4x384xf32>
    %125 = arith.select %123, %116, %124 : vector<4x384xi1>, vector<4x384xf32>
    %cst_49 = arith.constant 0.000000e+00 : f32
    %126 = vector.broadcast %cst_49 : f32 to vector<4x1xf32>
    %127 = vector.extract_strided_slice %53 {offsets = [0, 0], sizes = [4, 383], strides = [1, 1]} : vector<4x384xf32> to vector<4x383xf32>
    %128 = tpu.concatenate %126, %127 in 1 : vector<4x1xf32>, vector<4x383xf32> -> vector<4x384xf32>
    %cst_50 = arith.constant 1.000000e+00 : f32
    %129 = vector.broadcast %cst_50 : f32 to vector<1x384xf32>
    %130 = arith.cmpf oge, %3, %129 : vector<1x384xf32>
    %cst_51 = arith.constant 4.800000e+01 : f32
    %131 = vector.broadcast %cst_51 : f32 to vector<1x384xf32>
    %132 = arith.cmpf ole, %3, %131 : vector<1x384xf32>
    %133 = arith.andi %130, %132 : vector<1x384xi1>
    %cst_52 = arith.constant 0.000000e+00 : f32
    %134 = vector.shape_cast %133 : vector<1x384xi1> to vector<1x384xi1>
    %135 = vector.broadcast %134 : vector<1x384xi1> to vector<4x384xi1>
    %136 = vector.broadcast %cst_52 : f32 to vector<4x384xf32>
    %137 = arith.select %135, %128, %136 : vector<4x384xi1>, vector<4x384xf32>
    %cst_53 = arith.constant 0.000000e+00 : f32
    %138 = vector.broadcast %cst_53 : f32 to vector<4x1xf32>
    %139 = vector.extract_strided_slice %53 {offsets = [0, 1], sizes = [4, 383], strides = [1, 1]} : vector<4x384xf32> to vector<4x383xf32>
    %140 = tpu.concatenate %139, %138 in 1 : vector<4x383xf32>, vector<4x1xf32> -> vector<4x384xf32>
    %cst_54 = arith.constant -1.000000e+00 : f32
    %141 = vector.broadcast %cst_54 : f32 to vector<1x384xf32>
    %142 = arith.cmpf oge, %3, %141 : vector<1x384xf32>
    %cst_55 = arith.constant 4.600000e+01 : f32
    %143 = vector.broadcast %cst_55 : f32 to vector<1x384xf32>
    %144 = arith.cmpf ole, %3, %143 : vector<1x384xf32>
    %145 = arith.andi %142, %144 : vector<1x384xi1>
    %cst_56 = arith.constant 0.000000e+00 : f32
    %146 = vector.shape_cast %145 : vector<1x384xi1> to vector<1x384xi1>
    %147 = vector.broadcast %146 : vector<1x384xi1> to vector<4x384xi1>
    %148 = vector.broadcast %cst_56 : f32 to vector<4x384xf32>
    %149 = arith.select %147, %140, %148 : vector<4x384xi1>, vector<4x384xf32>
    %cst_57 = arith.constant 0.000000e+00 : f32
    %150 = vector.broadcast %cst_57 : f32 to vector<4x2xf32>
    %151 = vector.extract_strided_slice %53 {offsets = [0, 2], sizes = [4, 382], strides = [1, 1]} : vector<4x384xf32> to vector<4x382xf32>
    %152 = tpu.concatenate %151, %150 in 1 : vector<4x382xf32>, vector<4x2xf32> -> vector<4x384xf32>
    %cst_58 = arith.constant -2.000000e+00 : f32
    %153 = vector.broadcast %cst_58 : f32 to vector<1x384xf32>
    %154 = arith.cmpf oge, %3, %153 : vector<1x384xf32>
    %cst_59 = arith.constant 4.500000e+01 : f32
    %155 = vector.broadcast %cst_59 : f32 to vector<1x384xf32>
    %156 = arith.cmpf ole, %3, %155 : vector<1x384xf32>
    %157 = arith.andi %154, %156 : vector<1x384xi1>
    %cst_60 = arith.constant 0.000000e+00 : f32
    %158 = vector.shape_cast %157 : vector<1x384xi1> to vector<1x384xi1>
    %159 = vector.broadcast %158 : vector<1x384xi1> to vector<4x384xi1>
    %160 = vector.broadcast %cst_60 : f32 to vector<4x384xf32>
    %161 = arith.select %159, %152, %160 : vector<4x384xi1>, vector<4x384xf32>
    %cst_61 = arith.constant 0.000000e+00 : f32
    %162 = vector.broadcast %cst_61 : f32 to vector<4x3xf32>
    %163 = vector.extract_strided_slice %53 {offsets = [0, 3], sizes = [4, 381], strides = [1, 1]} : vector<4x384xf32> to vector<4x381xf32>
    %164 = tpu.concatenate %163, %162 in 1 : vector<4x381xf32>, vector<4x3xf32> -> vector<4x384xf32>
    %cst_62 = arith.constant -3.000000e+00 : f32
    %165 = vector.broadcast %cst_62 : f32 to vector<1x384xf32>
    %166 = arith.cmpf oge, %3, %165 : vector<1x384xf32>
    %cst_63 = arith.constant 4.400000e+01 : f32
    %167 = vector.broadcast %cst_63 : f32 to vector<1x384xf32>
    %168 = arith.cmpf ole, %3, %167 : vector<1x384xf32>
    %169 = arith.andi %166, %168 : vector<1x384xi1>
    %cst_64 = arith.constant 0.000000e+00 : f32
    %170 = vector.shape_cast %169 : vector<1x384xi1> to vector<1x384xi1>
    %171 = vector.broadcast %170 : vector<1x384xi1> to vector<4x384xi1>
    %172 = vector.broadcast %cst_64 : f32 to vector<4x384xf32>
    %173 = arith.select %171, %164, %172 : vector<4x384xi1>, vector<4x384xf32>
    %cst_65 = arith.constant 0.000000e+00 : f32
    %174 = vector.broadcast %cst_65 : f32 to vector<4x4xf32>
    %175 = vector.extract_strided_slice %53 {offsets = [0, 4], sizes = [4, 380], strides = [1, 1]} : vector<4x384xf32> to vector<4x380xf32>
    %176 = tpu.concatenate %175, %174 in 1 : vector<4x380xf32>, vector<4x4xf32> -> vector<4x384xf32>
    %cst_66 = arith.constant -4.000000e+00 : f32
    %177 = vector.broadcast %cst_66 : f32 to vector<1x384xf32>
    %178 = arith.cmpf oge, %3, %177 : vector<1x384xf32>
    %cst_67 = arith.constant 4.300000e+01 : f32
    %179 = vector.broadcast %cst_67 : f32 to vector<1x384xf32>
    %180 = arith.cmpf ole, %3, %179 : vector<1x384xf32>
    %181 = arith.andi %178, %180 : vector<1x384xi1>
    %cst_68 = arith.constant 0.000000e+00 : f32
    %182 = vector.shape_cast %181 : vector<1x384xi1> to vector<1x384xi1>
    %183 = vector.broadcast %182 : vector<1x384xi1> to vector<4x384xi1>
    %184 = vector.broadcast %cst_68 : f32 to vector<4x384xf32>
    %185 = arith.select %183, %176, %184 : vector<4x384xi1>, vector<4x384xf32>
    %cst_69 = arith.constant 0.000000e+00 : f32
    %186 = vector.broadcast %cst_69 : f32 to vector<4x5xf32>
    %187 = vector.extract_strided_slice %53 {offsets = [0, 5], sizes = [4, 379], strides = [1, 1]} : vector<4x384xf32> to vector<4x379xf32>
    %188 = tpu.concatenate %187, %186 in 1 : vector<4x379xf32>, vector<4x5xf32> -> vector<4x384xf32>
    %cst_70 = arith.constant -5.000000e+00 : f32
    %189 = vector.broadcast %cst_70 : f32 to vector<1x384xf32>
    %190 = arith.cmpf oge, %3, %189 : vector<1x384xf32>
    %cst_71 = arith.constant 4.200000e+01 : f32
    %191 = vector.broadcast %cst_71 : f32 to vector<1x384xf32>
    %192 = arith.cmpf ole, %3, %191 : vector<1x384xf32>
    %193 = arith.andi %190, %192 : vector<1x384xi1>
    %cst_72 = arith.constant 0.000000e+00 : f32
    %194 = vector.shape_cast %193 : vector<1x384xi1> to vector<1x384xi1>
    %195 = vector.broadcast %194 : vector<1x384xi1> to vector<4x384xi1>
    %196 = vector.broadcast %cst_72 : f32 to vector<4x384xf32>
    %197 = arith.select %195, %188, %196 : vector<4x384xi1>, vector<4x384xf32>
    %cst_73 = arith.constant 0.000000e+00 : f32
    %198 = vector.broadcast %cst_73 : f32 to vector<4x6xf32>
    %199 = vector.extract_strided_slice %53 {offsets = [0, 6], sizes = [4, 378], strides = [1, 1]} : vector<4x384xf32> to vector<4x378xf32>
    %200 = tpu.concatenate %199, %198 in 1 : vector<4x378xf32>, vector<4x6xf32> -> vector<4x384xf32>
    %cst_74 = arith.constant -6.000000e+00 : f32
    %201 = vector.broadcast %cst_74 : f32 to vector<1x384xf32>
    %202 = arith.cmpf oge, %3, %201 : vector<1x384xf32>
    %cst_75 = arith.constant 4.100000e+01 : f32
    %203 = vector.broadcast %cst_75 : f32 to vector<1x384xf32>
    %204 = arith.cmpf ole, %3, %203 : vector<1x384xf32>
    %205 = arith.andi %202, %204 : vector<1x384xi1>
    %cst_76 = arith.constant 0.000000e+00 : f32
    %206 = vector.shape_cast %205 : vector<1x384xi1> to vector<1x384xi1>
    %207 = vector.broadcast %206 : vector<1x384xi1> to vector<4x384xi1>
    %208 = vector.broadcast %cst_76 : f32 to vector<4x384xf32>
    %209 = arith.select %207, %200, %208 : vector<4x384xi1>, vector<4x384xf32>
    %cst_77 = arith.constant 0.000000e+00 : f32
    %210 = vector.broadcast %cst_77 : f32 to vector<4x7xf32>
    %211 = vector.extract_strided_slice %53 {offsets = [0, 7], sizes = [4, 377], strides = [1, 1]} : vector<4x384xf32> to vector<4x377xf32>
    %212 = tpu.concatenate %211, %210 in 1 : vector<4x377xf32>, vector<4x7xf32> -> vector<4x384xf32>
    %cst_78 = arith.constant -7.000000e+00 : f32
    %213 = vector.broadcast %cst_78 : f32 to vector<1x384xf32>
    %214 = arith.cmpf oge, %3, %213 : vector<1x384xf32>
    %cst_79 = arith.constant 4.000000e+01 : f32
    %215 = vector.broadcast %cst_79 : f32 to vector<1x384xf32>
    %216 = arith.cmpf ole, %3, %215 : vector<1x384xf32>
    %217 = arith.andi %214, %216 : vector<1x384xi1>
    %cst_80 = arith.constant 0.000000e+00 : f32
    %218 = vector.shape_cast %217 : vector<1x384xi1> to vector<1x384xi1>
    %219 = vector.broadcast %218 : vector<1x384xi1> to vector<4x384xi1>
    %220 = vector.broadcast %cst_80 : f32 to vector<4x384xf32>
    %221 = arith.select %219, %212, %220 : vector<4x384xi1>, vector<4x384xf32>
    %222 = tpu.concatenate %65, %77, %89, %101, %113, %125, %137, %53, %149, %161, %173, %185, %197, %209, %221, %2 in 0 : vector<4x384xf32>, vector<4x384xf32>, vector<4x384xf32>, vector<4x384xf32>, vector<4x384xf32>, vector<4x384xf32>, vector<4x384xf32>, vector<4x384xf32>, vector<4x384xf32>, vector<4x384xf32>, vector<4x384xf32>, vector<4x384xf32>, vector<4x384xf32>, vector<4x384xf32>, vector<4x384xf32>, vector<1x384xf32> -> vector<61x384xf32>
    %c0_81 = arith.constant 0 : index
    %c0_82 = arith.constant 0 : index
    %223 = vector.load %arg7[%c0_81, %c0_82] : memref<8x61xbf16, #tpu.memory_space<vmem>>, vector<8x61xbf16>
    %224 = arith.truncf %222 : vector<61x384xf32> to vector<61x384xbf16>
    %cst_83 = arith.constant dense<0.000000e+00> : vector<8x384xf32>
    %225 = tpu.matmul %223, %224, %cst_83 {dimension_numbers = #tpu.dot_dimension_numbers<[1], [0], [0], [1], [0, 0, 1, 1], [], []>} : vector<8x61xbf16>, vector<61x384xbf16>, vector<8x384xf32> -> vector<8x384xf32>
    %cst_84 = arith.constant 0.000000e+00 : f32
    %226 = vector.broadcast %cst_84 : f32 to vector<8x384xf32>
    %227 = arith.cmpf ogt, %225, %226 : vector<8x384xf32>
    %cst_85 = arith.constant 3.000000e-01 : f32
    %228 = vector.broadcast %cst_85 : f32 to vector<8x384xf32>
    %229 = arith.mulf %228, %225 : vector<8x384xf32>
    %230 = arith.select %227, %225, %229 : vector<8x384xi1>, vector<8x384xf32>
    %cst_86 = arith.constant 0.000000e+00 : f32
    %231 = vector.broadcast %cst_86 : f32 to vector<8x1xf32>
    %232 = vector.extract_strided_slice %230 {offsets = [0, 1], sizes = [8, 383], strides = [1, 1]} : vector<8x384xf32> to vector<8x383xf32>
    %233 = tpu.concatenate %232, %231 in 1 : vector<8x383xf32>, vector<8x1xf32> -> vector<8x384xf32>
    %cst_87 = arith.constant 0.000000e+00 : f32
    %234 = vector.broadcast %cst_87 : f32 to vector<8x2xf32>
    %235 = vector.extract_strided_slice %230 {offsets = [0, 2], sizes = [8, 382], strides = [1, 1]} : vector<8x384xf32> to vector<8x382xf32>
    %236 = tpu.concatenate %235, %234 in 1 : vector<8x382xf32>, vector<8x2xf32> -> vector<8x384xf32>
    %237 = tpu.concatenate %230, %233, %236, %2 in 0 : vector<8x384xf32>, vector<8x384xf32>, vector<8x384xf32>, vector<1x384xf32> -> vector<25x384xf32>
    %c0_88 = arith.constant 0 : index
    %c0_89 = arith.constant 0 : index
    %238 = vector.load %arg8[%c0_88, %c0_89] : memref<8x25xbf16, #tpu.memory_space<vmem>>, vector<8x25xbf16>
    %239 = arith.truncf %237 : vector<25x384xf32> to vector<25x384xbf16>
    %cst_90 = arith.constant dense<0.000000e+00> : vector<8x384xf32>
    %240 = tpu.matmul %238, %239, %cst_90 {dimension_numbers = #tpu.dot_dimension_numbers<[1], [0], [0], [1], [0, 0, 1, 1], [], []>} : vector<8x25xbf16>, vector<25x384xbf16>, vector<8x384xf32> -> vector<8x384xf32>
    %cst_91 = arith.constant 0.000000e+00 : f32
    %241 = vector.broadcast %cst_91 : f32 to vector<8x384xf32>
    %242 = arith.cmpf ogt, %240, %241 : vector<8x384xf32>
    %cst_92 = arith.constant 3.000000e-01 : f32
    %243 = vector.broadcast %cst_92 : f32 to vector<8x384xf32>
    %244 = arith.mulf %243, %240 : vector<8x384xf32>
    %245 = arith.select %242, %240, %244 : vector<8x384xi1>, vector<8x384xf32>
    %c0_93 = arith.constant 0 : index
    %c0_94 = arith.constant 0 : index
    %246 = vector.load %arg9[%c0_93, %c0_94] : memref<4x9xbf16, #tpu.memory_space<vmem>>, vector<4x9xbf16>
    %247 = tpu.concatenate %245, %2 in 0 : vector<8x384xf32>, vector<1x384xf32> -> vector<9x384xf32>
    %248 = arith.truncf %247 : vector<9x384xf32> to vector<9x384xbf16>
    %cst_95 = arith.constant dense<0.000000e+00> : vector<4x384xf32>
    %249 = tpu.matmul %246, %248, %cst_95 {dimension_numbers = #tpu.dot_dimension_numbers<[1], [0], [0], [1], [0, 0, 1, 1], [], []>} : vector<4x9xbf16>, vector<9x384xbf16>, vector<4x384xf32> -> vector<4x384xf32>
    %cst_96 = arith.constant 0.000000e+00 : f32
    %250 = vector.broadcast %cst_96 : f32 to vector<4x384xf32>
    %251 = arith.cmpf ogt, %249, %250 : vector<4x384xf32>
    %cst_97 = arith.constant 3.000000e-01 : f32
    %252 = vector.broadcast %cst_97 : f32 to vector<4x384xf32>
    %253 = arith.mulf %252, %249 : vector<4x384xf32>
    %254 = arith.select %251, %249, %253 : vector<4x384xi1>, vector<4x384xf32>
    %c0_98 = arith.constant 0 : index
    %c0_99 = arith.constant 0 : index
    %255 = vector.load %arg10[%c0_98, %c0_99] : memref<1x5xbf16, #tpu.memory_space<vmem>>, vector<1x5xbf16>
    %256 = tpu.concatenate %254, %2 in 0 : vector<4x384xf32>, vector<1x384xf32> -> vector<5x384xf32>
    %257 = arith.truncf %256 : vector<5x384xf32> to vector<5x384xbf16>
    %cst_100 = arith.constant dense<0.000000e+00> : vector<1x384xf32>
    %258 = tpu.matmul %255, %257, %cst_100 {dimension_numbers = #tpu.dot_dimension_numbers<[1], [0], [0], [1], [0, 0, 1, 1], [], []>} : vector<1x5xbf16>, vector<5x384xbf16>, vector<1x384xf32> -> vector<1x384xf32>
    %cst_101 = arith.constant 0.000000e+00 : f32
    %259 = vector.broadcast %cst_101 : f32 to vector<1x384xf32>
    %260 = arith.cmpf ogt, %258, %259 : vector<1x384xf32>
    %cst_102 = arith.constant 3.000000e-01 : f32
    %261 = vector.broadcast %cst_102 : f32 to vector<1x384xf32>
    %262 = arith.mulf %261, %258 : vector<1x384xf32>
    %263 = arith.select %260, %258, %262 : vector<1x384xi1>, vector<1x384xf32>
    %c0_103 = arith.constant 0 : index
    %c0_104 = arith.constant 0 : index
    %264 = vector.load %arg11[%c0_103, %c0_104] : memref<32x384xf32, #tpu.memory_space<vmem>>, vector<32x384xf32>
    %265 = vector.broadcast %263 : vector<1x384xf32> to vector<32x384xf32>
    %266 = arith.mulf %264, %265 : vector<32x384xf32>
    %267 = arith.truncf %266 : vector<32x384xf32> to vector<32x384xbf16>
    %268 = arith.extf %267 : vector<32x384xbf16> to vector<32x384xf32>
    %269 = arith.subf %266, %268 : vector<32x384xf32>
    %270 = arith.truncf %269 : vector<32x384xf32> to vector<32x384xbf16>
    %cst_105 = arith.constant dense<0.000000e+00> : vector<32x8xf32>
    %271 = tpu.matmul %267, %4, %cst_105 {dimension_numbers = #tpu.dot_dimension_numbers<[1], [0], [0], [1], [0, 0, 1, 1], [], []>} : vector<32x384xbf16>, vector<384x8xbf16>, vector<32x8xf32> -> vector<32x8xf32>
    %cst_106 = arith.constant dense<0.000000e+00> : vector<32x8xf32>
    %272 = tpu.matmul %270, %4, %cst_106 {dimension_numbers = #tpu.dot_dimension_numbers<[1], [0], [0], [1], [0, 0, 1, 1], [], []>} : vector<32x384xbf16>, vector<384x8xbf16>, vector<32x8xf32> -> vector<32x8xf32>
    %273 = arith.addf %271, %272 : vector<32x8xf32>
    %c0_107 = arith.constant 0 : index
    %c0_108 = arith.constant 0 : index
    %274 = vector.load %arg12[%c0_107, %c0_108] : memref<32x1xf32, #tpu.memory_space<vmem>>, vector<32x1xf32>
    %275 = vector.broadcast %274 : vector<32x1xf32> to vector<32x8xf32>
    %276 = arith.addf %273, %275 : vector<32x8xf32>
    %c0_109 = arith.constant 0 : index
    %c0_110 = arith.constant 0 : index
    %c0_111 = arith.constant 0 : index
    %277 = vector.load %arg13[%c0_109, %c0_110, %c0_111] : memref<1x32x8xf32, #tpu.memory_space<vmem>>, vector<1x32x8xf32>
    %278 = vector.shape_cast %277 : vector<1x32x8xf32> to vector<32x8xf32>
    %279 = vector.shape_cast %276 : vector<32x8xf32> to vector<1x32x8xf32>
    tpu.vector_store %arg13[%c0_109, %c0_110, %c0_111], %279 {strides = array<i32>} : memref<1x32x8xf32, #tpu.memory_space<vmem>>, vector<1x32x8xf32>,
    return
  }
  func.func @transform_0(%arg0: i32) -> (i32, i32, i32) {
    %c0_i32 = arith.constant 0 : i32
    %c0_i32_0 = arith.constant 0 : i32
    %c0_i32_1 = arith.constant 0 : i32
    return %arg0, %c0_i32, %c0_i32_0 : i32, i32, i32
  }
  func.func @transform_1(%arg0: i32) -> (i32, i32) {
    %c0_i32 = arith.constant 0 : i32
    %c0_i32_0 = arith.constant 0 : i32
    %c0_i32_1 = arith.constant 0 : i32
    return %c0_i32, %c0_i32_0 : i32, i32
  }
  func.func @transform_2(%arg0: i32) -> (i32, i32) {
    %c0_i32 = arith.constant 0 : i32
    %c0_i32_0 = arith.constant 0 : i32
    %c0_i32_1 = arith.constant 0 : i32
    return %c0_i32, %c0_i32_0 : i32, i32
  }
  func.func @transform_3(%arg0: i32) -> (i32, i32) {
    %c0_i32 = arith.constant 0 : i32
    %c0_i32_0 = arith.constant 0 : i32
    %c0_i32_1 = arith.constant 0 : i32
    return %c0_i32, %c0_i32_0 : i32, i32
  }
  func.func @transform_4(%arg0: i32) -> (i32, i32) {
    %c0_i32 = arith.constant 0 : i32
    %c0_i32_0 = arith.constant 0 : i32
    %c0_i32_1 = arith.constant 0 : i32
    return %c0_i32, %c0_i32_0 : i32, i32
  }
  func.func @transform_5(%arg0: i32) -> (i32, i32) {
    %c0_i32 = arith.constant 0 : i32
    %c0_i32_0 = arith.constant 0 : i32
    %c0_i32_1 = arith.constant 0 : i32
    return %c0_i32, %c0_i32_0 : i32, i32
  }
  func.func @transform_6(%arg0: i32) -> (i32, i32) {
    %c0_i32 = arith.constant 0 : i32
    %c0_i32_0 = arith.constant 0 : i32
    %c0_i32_1 = arith.constant 0 : i32
    return %c0_i32, %c0_i32_0 : i32, i32
  }
  func.func @transform_7(%arg0: i32) -> (i32, i32) {
    %c0_i32 = arith.constant 0 : i32
    %c0_i32_0 = arith.constant 0 : i32
    %c0_i32_1 = arith.constant 0 : i32
    return %c0_i32, %c0_i32_0 : i32, i32
  }
  func.func @transform_8(%arg0: i32) -> (i32, i32) {
    %c0_i32 = arith.constant 0 : i32
    %c0_i32_0 = arith.constant 0 : i32
    %c0_i32_1 = arith.constant 0 : i32
    return %c0_i32, %c0_i32_0 : i32, i32
  }
  func.func @transform_9(%arg0: i32) -> (i32, i32) {
    %c0_i32 = arith.constant 0 : i32
    %c0_i32_0 = arith.constant 0 : i32
    %c0_i32_1 = arith.constant 0 : i32
    return %c0_i32, %c0_i32_0 : i32, i32
  }
  func.func @transform_10(%arg0: i32) -> (i32, i32) {
    %c0_i32 = arith.constant 0 : i32
    %c0_i32_0 = arith.constant 0 : i32
    %c0_i32_1 = arith.constant 0 : i32
    return %c0_i32, %c0_i32_0 : i32, i32
  }
  func.func @transform_11(%arg0: i32) -> (i32, i32) {
    %c0_i32 = arith.constant 0 : i32
    %c0_i32_0 = arith.constant 0 : i32
    %c0_i32_1 = arith.constant 0 : i32
    return %c0_i32, %c0_i32_0 : i32, i32
  }
  func.func @transform_12(%arg0: i32) -> (i32, i32, i32) {
    %c0_i32 = arith.constant 0 : i32
    %c0_i32_0 = arith.constant 0 : i32
    %c0_i32_1 = arith.constant 0 : i32
    return %arg0, %c0_i32, %c0_i32_0 : i32, i32, i32
  }
}

</mosaic_0001>

<llo_original>
// kernel: tpu_custom_call.1
$region0: #{tpu_custom_call.1}
  #allocation0 [shape = 'u32[]', space=smem, size = 0x4, offset = 0x4, fixed_abs, tag = 'smem constant byte address 0x4 - core index']
  #allocation1 [shape = 'u32[72,128]{1,0:T(1,128)}', space=vmem, size = 0x9000, scoped, tag = 'internal scratch']
  %s0 = inlined_call_operand.vmem [shape: f32[1,4,384], index: 0, kind: input, shape index: {}]
  %s1 = inlined_call_operand.vmem [shape: f32[1,384], index: 1, kind: input, shape index: {}]
  %s2 = inlined_call_operand.vmem [shape: bf16[384,8], index: 2, kind: input, shape index: {}]
  %s3 = inlined_call_operand.vmem [shape: bf16[8,384], index: 3, kind: input, shape index: {}]
  %s4 = inlined_call_operand.vmem [shape: f32[4,384], index: 4, kind: input, shape index: {}]
  %s5 = inlined_call_operand.vmem [shape: f32[4,384], index: 5, kind: input, shape index: {}]
  %s6 = inlined_call_operand.vmem [shape: bf16[8,61], index: 6, kind: input, shape index: {}]
  %s7 = inlined_call_operand.vmem [shape: bf16[8,25], index: 7, kind: input, shape index: {}]
  %s8 = inlined_call_operand.vmem [shape: bf16[4,9], index: 8, kind: input, shape index: {}]
  %s9 = inlined_call_operand.vmem [shape: bf16[1,5], index: 9, kind: input, shape index: {}]
  %s10 = inlined_call_operand.vmem [shape: f32[32,384], index: 10, kind: input, shape index: {}]
  %s11 = inlined_call_operand.vmem [shape: f32[32,1], index: 11, kind: input, shape index: {}]
  %s12 = inlined_call_operand.vmem [shape: f32[1,32,8], index: 12, kind: output, shape index: {}]
  %s13 = sld [smem:[#allocation0]]
  $region58: #{tpu_custom_call.1} parent=0
    _
  %s15 = ssub.s32 1, %s13
  %s16 = scalar_select 0, %s15, %s13
  // Predicated region
  $region2: #{tpu_custom_call.1} parent=0 // pred_check
    _
  $region3: #{tpu_custom_call.1} parent=0 // pred_check_branch
    %18 = sbr.rel (0) target = $region5
  $region4: #{tpu_custom_call.1} parent=0 // pred_region
    _
  $region5: #{tpu_custom_call.1} parent=0 // pred_fallthru
    _
  // Predicated region
  $region6: #{tpu_custom_call.1} parent=0 // pred_check
    _
  $region7: #{tpu_custom_call.1} parent=0 // pred_check_branch
    %20 = sbr.rel (0) target = $region9
  $region8: #{tpu_custom_call.1} parent=0 // pred_region
    _
  $region9: #{tpu_custom_call.1} parent=0 // pred_fallthru
    _
  // Predicated region
  $region10: #{tpu_custom_call.1} parent=0 // pred_check
    _
  $region11: #{tpu_custom_call.1} parent=0 // pred_check_branch
    %22 = sbr.rel (0) target = $region13
  $region12: #{tpu_custom_call.1} parent=0 // pred_region
    _
  $region13: #{tpu_custom_call.1} parent=0 // pred_fallthru
    _
  // Predicated region
  $region14: #{tpu_custom_call.1} parent=0 // pred_check
    _
  $region15: #{tpu_custom_call.1} parent=0 // pred_check_branch
    %24 = sbr.rel (0) target = $region17
  $region16: #{tpu_custom_call.1} parent=0 // pred_region
    _
  $region17: #{tpu_custom_call.1} parent=0 // pred_fallthru
    _
  // Predicated region
  $region18: #{tpu_custom_call.1} parent=0 // pred_check
    _
  $region19: #{tpu_custom_call.1} parent=0 // pred_check_branch
    %26 = sbr.rel (0) target = $region21
  $region20: #{tpu_custom_call.1} parent=0 // pred_region
    _
  $region21: #{tpu_custom_call.1} parent=0 // pred_fallthru
    _
  // Predicated region
  $region22: #{tpu_custom_call.1} parent=0 // pred_check
    _
  $region23: #{tpu_custom_call.1} parent=0 // pred_check_branch
    %28 = sbr.rel (0) target = $region25
  $region24: #{tpu_custom_call.1} parent=0 // pred_region
    _
  $region25: #{tpu_custom_call.1} parent=0 // pred_fallthru
    _
  // Predicated region
  $region26: #{tpu_custom_call.1} parent=0 // pred_check
    _
  $region27: #{tpu_custom_call.1} parent=0 // pred_check_branch
    %30 = sbr.rel (0) target = $region29
  $region28: #{tpu_custom_call.1} parent=0 // pred_region
    _
  $region29: #{tpu_custom_call.1} parent=0 // pred_fallthru
    _
  // Predicated region
  $region30: #{tpu_custom_call.1} parent=0 // pred_check
    _
  $region31: #{tpu_custom_call.1} parent=0 // pred_check_branch
    %32 = sbr.rel (0) target = $region33
  $region32: #{tpu_custom_call.1} parent=0 // pred_region
    _
  $region33: #{tpu_custom_call.1} parent=0 // pred_fallthru
    _
  // Predicated region
  $region34: #{tpu_custom_call.1} parent=0 // pred_check
    _
  $region35: #{tpu_custom_call.1} parent=0 // pred_check_branch
    %34 = sbr.rel (0) target = $region37
  $region36: #{tpu_custom_call.1} parent=0 // pred_region
    _
  $region37: #{tpu_custom_call.1} parent=0 // pred_fallthru
    _
  // Predicated region
  $region38: #{tpu_custom_call.1} parent=0 // pred_check
    _
  $region39: #{tpu_custom_call.1} parent=0 // pred_check_branch
    %36 = sbr.rel (0) target = $region41
  $region40: #{tpu_custom_call.1} parent=0 // pred_region
    _
  $region41: #{tpu_custom_call.1} parent=0 // pred_fallthru
    _
  // Predicated region
  $region42: #{tpu_custom_call.1} parent=0 // pred_check
    _
  $region43: #{tpu_custom_call.1} parent=0 // pred_check_branch
    %38 = sbr.rel (0) target = $region45
  $region44: #{tpu_custom_call.1} parent=0 // pred_region
    _
  $region45: #{tpu_custom_call.1} parent=0 // pred_fallthru
    _
  // Predicated region
  $region46: #{tpu_custom_call.1} parent=0 // pred_check
    _
  $region47: #{tpu_custom_call.1} parent=0 // pred_check_branch
    %40 = sbr.rel (0) target = $region49
  $region48: #{tpu_custom_call.1} parent=0 // pred_region
    _
  $region49: #{tpu_custom_call.1} parent=0 // pred_fallthru
    _
  %v42 = vld [vmem:[%s0] sm:$0xff]
  %v43 = vld [vmem:[%s0 + $0x8] sm:$0xf]
  %v44 = vld [vmem:[%s1] sm:$0x7]
  %v45 = vld [vmem:[%s2] sm:$0xf]
  %v46 = vld [vmem:[%s2 + $0x4] sm:$0xf]
  %v47 = vld [vmem:[%s2 + $0x8] sm:$0xf]
  %v48 = vld [vmem:[%s2 + $0xc] sm:$0xf]
  %v49 = vld [vmem:[%s2 + $0x10] sm:$0xf]
  %v50 = vld [vmem:[%s2 + $0x14] sm:$0xf]
  %v51 = vld [vmem:[%s2 + $0x18] sm:$0xf]
  %v52 = vld [vmem:[%s2 + $0x1c] sm:$0xf]
  %v53 = vld [vmem:[%s2 + $0x20] sm:$0xf]
  %v54 = vld [vmem:[%s2 + $0x24] sm:$0xf]
  %v55 = vld [vmem:[%s2 + $0x28] sm:$0xf]
  %v56 = vld [vmem:[%s2 + $0x2c] sm:$0xf]
  %v57 = vld [vmem:[%s2 + $0x30] sm:$0xf]
  %v58 = vld [vmem:[%s2 + $0x34] sm:$0xf]
  %v59 = vld [vmem:[%s2 + $0x38] sm:$0xf]
  %v60 = vld [vmem:[%s2 + $0x3c] sm:$0xf]
  %v61 = vld [vmem:[%s2 + $0x40] sm:$0xf]
  %v62 = vld [vmem:[%s2 + $0x44] sm:$0xf]
  %v63 = vld [vmem:[%s2 + $0x48] sm:$0xf]
  %v64 = vld [vmem:[%s2 + $0x4c] sm:$0xf]
  %v65 = vld [vmem:[%s2 + $0x50] sm:$0xf]
  %v66 = vld [vmem:[%s2 + $0x54] sm:$0xf]
  %v67 = vld [vmem:[%s2 + $0x58] sm:$0xf]
  %v68 = vld [vmem:[%s2 + $0x5c] sm:$0xf]
  %v69 = vld [vmem:[%s2 + $0x60] sm:$0xf]
  %v70 = vld [vmem:[%s2 + $0x64] sm:$0xf]
  %v71 = vld [vmem:[%s2 + $0x68] sm:$0xf]
  %v72 = vld [vmem:[%s2 + $0x6c] sm:$0xf]
  %v73 = vld [vmem:[%s2 + $0x70] sm:$0xf]
  %v74 = vld [vmem:[%s2 + $0x74] sm:$0xf]
  %v75 = vld [vmem:[%s2 + $0x78] sm:$0xf]
  %v76 = vld [vmem:[%s2 + $0x7c] sm:$0xf]
  %v77 = vld [vmem:[%s2 + $0x80] sm:$0xf]
  %v78 = vld [vmem:[%s2 + $0x84] sm:$0xf]
  %v79 = vld [vmem:[%s2 + $0x88] sm:$0xf]
  %v80 = vld [vmem:[%s2 + $0x8c] sm:$0xf]
  %v81 = vld [vmem:[%s2 + $0x90] sm:$0xf]
  %v82 = vld [vmem:[%s2 + $0x94] sm:$0xf]
  %v83 = vld [vmem:[%s2 + $0x98] sm:$0xf]
  %v84 = vld [vmem:[%s2 + $0x9c] sm:$0xf]
  %v85 = vld [vmem:[%s2 + $0xa0] sm:$0xf]
  %v86 = vld [vmem:[%s2 + $0xa4] sm:$0xf]
  %v87 = vld [vmem:[%s2 + $0xa8] sm:$0xf]
  %v88 = vld [vmem:[%s2 + $0xac] sm:$0xf]
  %v89 = vld [vmem:[%s2 + $0xb0] sm:$0xf]
  %v90 = vld [vmem:[%s2 + $0xb4] sm:$0xf]
  %v91 = vld [vmem:[%s2 + $0xb8] sm:$0xf]
  %v92 = vld [vmem:[%s2 + $0xbc] sm:$0xf]
  %v93 = vld [vmem:[%s3] sm:$0xff]
  %v94 = vld [vmem:[%s3 + $0x8] sm:$0xf]
  %97 = vst [vmem:[#allocation1] ss:$2 sm:$0xff] %v42
  %s98 = scalar_lea.vmem [#allocation1], 16
  %99 = vst [vmem:[%s98] ss:$2 sm:$0xff] %v43
  %v100 = vld.sshfl [vmem:[#allocation1] sm:$0xff pattern:$0x75316420]
  %v101 = vld.sshfl [vmem:[#allocation1 + $0x8] sm:$0xff pattern:$0x75316420]
  %v102 = vld.sshfl [vmem:[#allocation1 + $0x10] sm:$0xff pattern:$0x75316420]
  %vm106 = vcmask 1043456
  %v107 = vsel %vm106, %v100, 0.0
  %v108 = vrot.slane %v107, 4
  %v109 = vadd.f32 %v107, %v108
  %v110 = vrot.slane %v109, 2
  %v111 = vadd.f32 %v109, %v110
  %v112 = vrot.slane %v111, 1
  %v113 = vadd.f32 %v111, %v112
  %v114 = vsel %vm106, %v101, 0.0
  %v115 = vrot.slane %v114, 4
  %v116 = vadd.f32 %v114, %v115
  %v117 = vrot.slane %v116, 2
  %v118 = vadd.f32 %v116, %v117
  %v119 = vrot.slane %v118, 1
  %v120 = vadd.f32 %v118, %v119
  %v121 = vsel %vm106, %v102, 0.0
  %v122 = vrot.slane %v121, 4
  %v123 = vadd.f32 %v121, %v122
  %v124 = vrot.slane %v123, 2
  %v125 = vadd.f32 %v123, %v124
  %v126 = vrot.slane %v125, 1
  %v127 = vadd.f32 %v125, %v126
  %v128 = vpack.c.bf16 %v120, %v113
  %v129 = vpack.c.bf16 %v127, %v127
  %v130 = vunpack.c.l.bf16 %v128
  %v131 = vunpack.c.h.bf16 %v128
  %v132 = vunpack.c.l.bf16 %v129
  %v133 = vsub.f32 %v113, %v130
  %v134 = vsub.f32 %v120, %v131
  %v135 = vsub.f32 %v127, %v132
  %v136 = vpack.c.bf16 %v133, %v133
  %v137 = vpack.c.bf16 %v134, %v134
  %v138 = vpack.c.bf16 %v135, %v135
  %v187 = vunpack.c.l.b16 %v45
  %v188 = vunpack.c.l.b16 %v46
  %v189 = vunpack.c.l.b16 %v47
  %v190 = vunpack.c.l.b16 %v48
  %v191 = vunpack.c.l.b16 %v49
  %v192 = vunpack.c.l.b16 %v50
  %v193 = vunpack.c.l.b16 %v51
  %v194 = vunpack.c.l.b16 %v52
  %v195 = vunpack.c.l.b16 %v53
  %v196 = vunpack.c.l.b16 %v54
  %v197 = vunpack.c.l.b16 %v55
  %v198 = vunpack.c.l.b16 %v56
  %v199 = vunpack.c.l.b16 %v57
  %v200 = vunpack.c.l.b16 %v58
  %v201 = vunpack.c.l.b16 %v59
  %v202 = vunpack.c.l.b16 %v60
  %v203 = vunpack.c.l.b16 %v61
  %v204 = vunpack.c.l.b16 %v62
  %v205 = vunpack.c.l.b16 %v63
  %v206 = vunpack.c.l.b16 %v64
  %v207 = vunpack.c.l.b16 %v65
  %v208 = vunpack.c.l.b16 %v66
  %v209 = vunpack.c.l.b16 %v67
  %v210 = vunpack.c.l.b16 %v68
  %v211 = vunpack.c.l.b16 %v69
  %v212 = vunpack.c.l.b16 %v70
  %v213 = vunpack.c.l.b16 %v71
  %v214 = vunpack.c.l.b16 %v72
  %v215 = vunpack.c.l.b16 %v73
  %v216 = vunpack.c.l.b16 %v74
  %v217 = vunpack.c.l.b16 %v75
  %v218 = vunpack.c.l.b16 %v76
  %v219 = vunpack.c.l.b16 %v77
  %v220 = vunpack.c.l.b16 %v78
  %v221 = vunpack.c.l.b16 %v79
  %v222 = vunpack.c.l.b16 %v80
  %v223 = vunpack.c.l.b16 %v81
  %v224 = vunpack.c.l.b16 %v82
  %v225 = vunpack.c.l.b16 %v83
  %v226 = vunpack.c.l.b16 %v84
  %v227 = vunpack.c.l.b16 %v85
  %v228 = vunpack.c.l.b16 %v86
  %v229 = vunpack.c.l.b16 %v87
  %v230 = vunpack.c.l.b16 %v88
  %v231 = vunpack.c.l.b16 %v89
  %v232 = vunpack.c.l.b16 %v90
  %v233 = vunpack.c.l.b16 %v91
  %v234 = vunpack.c.l.b16 %v92
  %v235 = vpack.c.b16 %v188, %v187
  %v236 = vpack.c.b16 %v190, %v189
  %v237 = vpack.c.b16 %v192, %v191
  %v238 = vpack.c.b16 %v194, %v193
  %v239 = vpack.c.b16 %v196, %v195
  %v240 = vpack.c.b16 %v198, %v197
  %v241 = vpack.c.b16 %v200, %v199
  %v242 = vpack.c.b16 %v202, %v201
  %v243 = vpack.c.b16 %v204, %v203
  %v244 = vpack.c.b16 %v206, %v205
  %v245 = vpack.c.b16 %v208, %v207
  %v246 = vpack.c.b16 %v210, %v209
  %v247 = vpack.c.b16 %v212, %v211
  %v248 = vpack.c.b16 %v214, %v213
  %v249 = vpack.c.b16 %v216, %v215
  %v250 = vpack.c.b16 %v218, %v217
  %v251 = vpack.c.b16 %v220, %v219
  %v252 = vpack.c.b16 %v222, %v221
  %v253 = vpack.c.b16 %v224, %v223
  %v254 = vpack.c.b16 %v226, %v225
  %v255 = vpack.c.b16 %v228, %v227
  %v256 = vpack.c.b16 %v230, %v229
  %v257 = vpack.c.b16 %v232, %v231
  %v258 = vpack.c.b16 %v234, %v233
  %283 = vmatpush.bf16.msra.mxu0 %v242
  %284 = vmatpush.bf16.msra.mxu0 %v241
  %285 = vmatpush.bf16.msra.mxu0 %v240
  %286 = vmatpush.bf16.msra.mxu0 %v239
  %287 = vmatpush.bf16.msra.mxu0 %v238
  %288 = vmatpush.bf16.msra.mxu0 %v237
  %289 = vmatpush.bf16.msra.mxu0 %v236
  %290 = vmatpush.bf16.msra.mxu0 %v235
  %291 = vmatmul.bf16.gmra.mxu0 %v136
  %v292 = vpop.f32.mrf.mxu0
  %v293 = vadd.f32 0.0, %v292
  %v294 = vpop.f32.mrf.mxu0
  %295 = vdwg.mxu0
  %296 = vmatpush.bf16.msra.mxu0 %v250
  %297 = vmatpush.bf16.msra.mxu0 %v249
  %298 = vmatpush.bf16.msra.mxu0 %v248
  %299 = vmatpush.bf16.msra.mxu0 %v247
  %300 = vmatpush.bf16.msra.mxu0 %v246
  %301 = vmatpush.bf16.msra.mxu0 %v245
  %302 = vmatpush.bf16.msra.mxu0 %v244
  %303 = vmatpush.bf16.msra.mxu0 %v243
  %304 = vmatmul.bf16.gmra.mxu0 %v137
  %v305 = vpop.f32.mrf.mxu0
  %v306 = vadd.f32 %v293, %v305
  %v307 = vpop.f32.mrf.mxu0
  %308 = vdwg.mxu0
  %309 = vmatpush.bf16.msra.mxu0 %v258
  %310 = vmatpush.bf16.msra.mxu0 %v257
  %311 = vmatpush.bf16.msra.mxu0 %v256
  %312 = vmatpush.bf16.msra.mxu0 %v255
  %313 = vmatpush.bf16.msra.mxu0 %v254
  %314 = vmatpush.bf16.msra.mxu0 %v253
  %315 = vmatpush.bf16.msra.mxu0 %v252
  %316 = vmatpush.bf16.msra.mxu0 %v251
  %317 = vmatmul.bf16.gmra.mxu0 %v138
  %v318 = vpop.f32.mrf.mxu0
  %v319 = vadd.f32 %v306, %v318
  %v320 = vpop.f32.mrf.mxu0
  %321 = vdwg.mxu0
  %v324 = vperm.slane %v128, 0
  %v325 = vperm.slane %v128, 4
  %v326 = vperm.slane %v129, 0
  %330 = vmatpush.bf16.msra.mxu0 %v242
  %331 = vmatpush.bf16.msra.mxu0 %v241
  %332 = vmatpush.bf16.msra.mxu0 %v240
  %333 = vmatpush.bf16.msra.mxu0 %v239
  %334 = vmatpush.bf16.msra.mxu0 %v238
  %335 = vmatpush.bf16.msra.mxu0 %v237
  %336 = vmatpush.bf16.msra.mxu0 %v236
  %337 = vmatpush.bf16.msra.mxu0 %v235
  %338 = vmatmul.bf16.gmra.mxu0 %v324
  %v339 = vpop.f32.mrf.mxu0
  %v340 = vadd.f32 %v319, %v339
  %v341 = vpop.f32.mrf.mxu0
  %342 = vdwg.mxu0
  %343 = vmatpush.bf16.msra.mxu0 %v250
  %344 = vmatpush.bf16.msra.mxu0 %v249
  %345 = vmatpush.bf16.msra.mxu0 %v248
  %346 = vmatpush.bf16.msra.mxu0 %v247
  %347 = vmatpush.bf16.msra.mxu0 %v246
  %348 = vmatpush.bf16.msra.mxu0 %v245
  %349 = vmatpush.bf16.msra.mxu0 %v244
  %350 = vmatpush.bf16.msra.mxu0 %v243
  %351 = vmatmul.bf16.gmra.mxu0 %v325
  %v352 = vpop.f32.mrf.mxu0
  %v353 = vadd.f32 %v340, %v352
  %v354 = vpop.f32.mrf.mxu0
  %355 = vdwg.mxu0
  %356 = vmatpush.bf16.msra.mxu0 %v258
  %357 = vmatpush.bf16.msra.mxu0 %v257
  %358 = vmatpush.bf16.msra.mxu0 %v256
  %359 = vmatpush.bf16.msra.mxu0 %v255
  %360 = vmatpush.bf16.msra.mxu0 %v254
  %361 = vmatpush.bf16.msra.mxu0 %v253
  %362 = vmatpush.bf16.msra.mxu0 %v252
  %363 = vmatpush.bf16.msra.mxu0 %v251
  %364 = vmatmul.bf16.gmra.mxu0 %v326
  %v365 = vpop.f32.mrf.mxu0
  %v366 = vadd.f32 %v353, %v365
  %v367 = vpop.f32.mrf.mxu0
  %368 = vdwg.mxu0
  %v369 = vmul.f32 %v366, 0.0052083335
  %v370 = vpack.c.bf16 %v369, %v369
  %v371 = vunpack.c.l.bf16 %v370
  %v372 = vsub.f32 %v369, %v371
  %v373 = vpack.c.bf16 %v372, %v372
  %v376 = vunpack.c.l.b16 %v93
  %v377 = vunpack.c.h.b16 %v93
  %v378 = vunpack.c.l.b16 %v94
  %v379 = vpack.c.b16 %v376, %v376
  %v380 = vpack.c.b16 %v377, %v377
  %v381 = vpack.c.b16 %v378, %v378
  %vm382 = vcmask 64512
  %v384 = vsel %vm382, %v373, 0
  %v387 = vsel %vm106, %v379, 0
  %v390 = vsel %vm106, %v380, 0
  %v393 = vsel %vm106, %v381, 0
  %395 = vmatpush.bf16.msra.mxu0 0
  %396 = vmatpush.bf16.msra.mxu0 0
  %397 = vmatpush.bf16.msra.mxu0 0
  %398 = vmatpush.bf16.msra.mxu0 0
  %399 = vmatpush.bf16.msra.mxu0 0
  %400 = vmatpush.bf16.msra.mxu0 0
  %401 = vmatpush.bf16.msra.mxu0 0
  %402 = vmatpush.bf16.msra.mxu0 %v387
  %403 = vmatmul.bf16.gmra.mxu0 %v384
  %v404 = vpop.f32.mrf.mxu0
  %v405 = vadd.f32 0.0, %v404
  %v406 = vpop.f32.mrf.mxu0
  %407 = vdwg.mxu0
  %408 = vmatpush.bf16.msra.mxu0 0
  %409 = vmatpush.bf16.msra.mxu0 0
  %410 = vmatpush.bf16.msra.mxu0 0
  %411 = vmatpush.bf16.msra.mxu0 0
  %412 = vmatpush.bf16.msra.mxu0 0
  %413 = vmatpush.bf16.msra.mxu0 0
  %414 = vmatpush.bf16.msra.mxu0 0
  %415 = vmatpush.bf16.msra.mxu0 %v390
  %416 = vmatmul.bf16.gmra.mxu0 %v384
  %v417 = vpop.f32.mrf.mxu0
  %v418 = vadd.f32 0.0, %v417
  %v419 = vpop.f32.mrf.mxu0
  %420 = vdwg.mxu0
  %421 = vmatpush.bf16.msra.mxu0 0
  %422 = vmatpush.bf16.msra.mxu0 0
  %423 = vmatpush.bf16.msra.mxu0 0
  %424 = vmatpush.bf16.msra.mxu0 0
  %425 = vmatpush.bf16.msra.mxu0 0
  %426 = vmatpush.bf16.msra.mxu0 0
  %427 = vmatpush.bf16.msra.mxu0 0
  %428 = vmatpush.bf16.msra.mxu0 %v393
  %429 = vmatmul.bf16.gmra.mxu0 %v384
  %v430 = vpop.f32.mrf.mxu0
  %v431 = vadd.f32 0.0, %v430
  %v432 = vpop.f32.mrf.mxu0
  %433 = vdwg.mxu0
  %v435 = vsel %vm382, %v370, 0
  %437 = vmatpush.bf16.msra.mxu0 0
  %438 = vmatpush.bf16.msra.mxu0 0
  %439 = vmatpush.bf16.msra.mxu0 0
  %440 = vmatpush.bf16.msra.mxu0 0
  %441 = vmatpush.bf16.msra.mxu0 0
  %442 = vmatpush.bf16.msra.mxu0 0
  %443 = vmatpush.bf16.msra.mxu0 0
  %444 = vmatpush.bf16.msra.mxu0 %v387
  %445 = vmatmul.bf16.gmra.mxu0 %v435
  %v446 = vpop.f32.mrf.mxu0
  %v447 = vadd.f32 %v405, %v446
  %v448 = vpop.f32.mrf.mxu0
  %449 = vdwg.mxu0
  %450 = vmatpush.bf16.msra.mxu0 0
  %451 = vmatpush.bf16.msra.mxu0 0
  %452 = vmatpush.bf16.msra.mxu0 0
  %453 = vmatpush.bf16.msra.mxu0 0
  %454 = vmatpush.bf16.msra.mxu0 0
  %455 = vmatpush.bf16.msra.mxu0 0
  %456 = vmatpush.bf16.msra.mxu0 0
  %457 = vmatpush.bf16.msra.mxu0 %v390
  %458 = vmatmul.bf16.gmra.mxu0 %v435
  %v459 = vpop.f32.mrf.mxu0
  %v460 = vadd.f32 %v418, %v459
  %v461 = vpop.f32.mrf.mxu0
  %462 = vdwg.mxu0
  %463 = vmatpush.bf16.msra.mxu0 0
  %464 = vmatpush.bf16.msra.mxu0 0
  %465 = vmatpush.bf16.msra.mxu0 0
  %466 = vmatpush.bf16.msra.mxu0 0
  %467 = vmatpush.bf16.msra.mxu0 0
  %468 = vmatpush.bf16.msra.mxu0 0
  %469 = vmatpush.bf16.msra.mxu0 0
  %470 = vmatpush.bf16.msra.mxu0 %v393
  %471 = vmatmul.bf16.gmra.mxu0 %v435
  %v472 = vpop.f32.mrf.mxu0
  %v473 = vadd.f32 %v431, %v472
  %v474 = vpop.f32.mrf.mxu0
  %475 = vdwg.mxu0
  %v476 = vperm.slane %v447, 0
  %v477 = vperm.slane %v460, 0
  %v478 = vperm.slane %v473, 0
  %v481 = vrot.slane %v477, 4
  %v482 = vsel %vm106, %v476, %v481
  %v484 = vsub.f32 %v42, %v482
  %v485 = vsub.f32 %v43, %v478
  %v486 = vmul.f32 %v484, %v484
  %v487 = vmul.f32 %v485, %v485
  %490 = vst [vmem:[#allocation1] ss:$2 sm:$0xff] %v486
  %s491 = scalar_lea.vmem [#allocation1], 16
  %492 = vst [vmem:[%s491] ss:$2 sm:$0xff] %v487
  %v493 = vld.sshfl [vmem:[#allocation1] sm:$0xff pattern:$0x75316420]
  %v494 = vld.sshfl [vmem:[#allocation1 + $0x8] sm:$0xff pattern:$0x75316420]
  %v495 = vld.sshfl [vmem:[#allocation1 + $0x10] sm:$0xff pattern:$0x75316420]
  %v499 = vsel %vm106, %v493, 0.0
  %v500 = vrot.slane %v499, 4
  %v501 = vadd.f32 %v499, %v500
  %v502 = vrot.slane %v501, 2
  %v503 = vadd.f32 %v501, %v502
  %v504 = vrot.slane %v503, 1
  %v505 = vadd.f32 %v503, %v504
  %v506 = vsel %vm106, %v494, 0.0
  %v507 = vrot.slane %v506, 4
  %v508 = vadd.f32 %v506, %v507
  %v509 = vrot.slane %v508, 2
  %v510 = vadd.f32 %v508, %v509
  %v511 = vrot.slane %v510, 1
  %v512 = vadd.f32 %v510, %v511
  %v513 = vsel %vm106, %v495, 0.0
  %v514 = vrot.slane %v513, 4
  %v515 = vadd.f32 %v513, %v514
  %v516 = vrot.slane %v515, 2
  %v517 = vadd.f32 %v515, %v516
  %v518 = vrot.slane %v517, 1
  %v519 = vadd.f32 %v517, %v518
  %v520 = vpack.c.bf16 %v512, %v505
  %v521 = vpack.c.bf16 %v519, %v519
  %v522 = vunpack.c.l.bf16 %v520
  %v523 = vunpack.c.h.bf16 %v520
  %v524 = vunpack.c.l.bf16 %v521
  %v525 = vsub.f32 %v505, %v522
  %v526 = vsub.f32 %v512, %v523
  %v527 = vsub.f32 %v519, %v524
  %v528 = vpack.c.bf16 %v525, %v525
  %v529 = vpack.c.bf16 %v526, %v526
  %v530 = vpack.c.bf16 %v527, %v527
  %531 = vmatpush.bf16.msra.mxu0 %v242
  %532 = vmatpush.bf16.msra.mxu0 %v241
  %533 = vmatpush.bf16.msra.mxu0 %v240
  %534 = vmatpush.bf16.msra.mxu0 %v239
  %535 = vmatpush.bf16.msra.mxu0 %v238
  %536 = vmatpush.bf16.msra.mxu0 %v237
  %537 = vmatpush.bf16.msra.mxu0 %v236
  %538 = vmatpush.bf16.msra.mxu0 %v235
  %539 = vmatmul.bf16.gmra.mxu0 %v528
  %v540 = vpop.f32.mrf.mxu0
  %v541 = vadd.f32 0.0, %v540
  %v542 = vpop.f32.mrf.mxu0
  %543 = vdwg.mxu0
  %544 = vmatpush.bf16.msra.mxu0 %v250
  %545 = vmatpush.bf16.msra.mxu0 %v249
  %546 = vmatpush.bf16.msra.mxu0 %v248
  %547 = vmatpush.bf16.msra.mxu0 %v247
  %548 = vmatpush.bf16.msra.mxu0 %v246
  %549 = vmatpush.bf16.msra.mxu0 %v245
  %550 = vmatpush.bf16.msra.mxu0 %v244
  %551 = vmatpush.bf16.msra.mxu0 %v243
  %552 = vmatmul.bf16.gmra.mxu0 %v529
  %v553 = vpop.f32.mrf.mxu0
  %v554 = vadd.f32 %v541, %v553
  %v555 = vpop.f32.mrf.mxu0
  %556 = vdwg.mxu0
  %557 = vmatpush.bf16.msra.mxu0 %v258
  %558 = vmatpush.bf16.msra.mxu0 %v257
  %559 = vmatpush.bf16.msra.mxu0 %v256
  %560 = vmatpush.bf16.msra.mxu0 %v255
  %561 = vmatpush.bf16.msra.mxu0 %v254
  %562 = vmatpush.bf16.msra.mxu0 %v253
  %563 = vmatpush.bf16.msra.mxu0 %v252
  %564 = vmatpush.bf16.msra.mxu0 %v251
  %565 = vmatmul.bf16.gmra.mxu0 %v530
  %v566 = vpop.f32.mrf.mxu0
  %v567 = vadd.f32 %v554, %v566
  %v568 = vpop.f32.mrf.mxu0
  %569 = vdwg.mxu0
  %v572 = vperm.slane %v520, 0
  %v573 = vperm.slane %v520, 4
  %v574 = vperm.slane %v521, 0
  %578 = vmatpush.bf16.msra.mxu0 %v242
  %579 = vmatpush.bf16.msra.mxu0 %v241
  %580 = vmatpush.bf16.msra.mxu0 %v240
  %581 = vmatpush.bf16.msra.mxu0 %v239
  %582 = vmatpush.bf16.msra.mxu0 %v238
  %583 = vmatpush.bf16.msra.mxu0 %v237
  %584 = vmatpush.bf16.msra.mxu0 %v236
  %585 = vmatpush.bf16.msra.mxu0 %v235
  %586 = vmatmul.bf16.gmra.mxu0 %v572
  %v587 = vpop.f32.mrf.mxu0
  %v588 = vadd.f32 %v567, %v587
  %v589 = vpop.f32.mrf.mxu0
  %590 = vdwg.mxu0
  %591 = vmatpush.bf16.msra.mxu0 %v250
  %592 = vmatpush.bf16.msra.mxu0 %v249
  %593 = vmatpush.bf16.msra.mxu0 %v248
  %594 = vmatpush.bf16.msra.mxu0 %v247
  %595 = vmatpush.bf16.msra.mxu0 %v246
  %596 = vmatpush.bf16.msra.mxu0 %v245
  %597 = vmatpush.bf16.msra.mxu0 %v244
  %598 = vmatpush.bf16.msra.mxu0 %v243
  %599 = vmatmul.bf16.gmra.mxu0 %v573
  %v600 = vpop.f32.mrf.mxu0
  %v601 = vadd.f32 %v588, %v600
  %v602 = vpop.f32.mrf.mxu0
  %603 = vdwg.mxu0
  %604 = vmatpush.bf16.msra.mxu0 %v258
  %605 = vmatpush.bf16.msra.mxu0 %v257
  %606 = vmatpush.bf16.msra.mxu0 %v256
  %607 = vmatpush.bf16.msra.mxu0 %v255
  %608 = vmatpush.bf16.msra.mxu0 %v254
  %609 = vmatpush.bf16.msra.mxu0 %v253
  %610 = vmatpush.bf16.msra.mxu0 %v252
  %611 = vmatpush.bf16.msra.mxu0 %v251
  %612 = vmatmul.bf16.gmra.mxu0 %v574
  %v613 = vpop.f32.mrf.mxu0
  %v614 = vadd.f32 %v601, %v613
  %v615 = vpop.f32.mrf.mxu0
  %616 = vdwg.mxu0
  %v617 = vmul.f32 %v614, 0.0052083335
  %v618 = vadd.f32 %v617, 1e-05
  %v619 = vrsqrt.pop %v618
  %v620 = vmul.f32 %v619, %v618
  %v621 = vmul.f32 %v620, %v619
  %v622 = vmul.f32 0.5, %v621
  %v623 = vsub.f32 1.5, %v622
  %v624 = vmul.f32 %v619, %v623
  %vm625 = vweird.f32 %v618
  %vm626 = vweird.f32 %v619
  %vm627 = vmor %vm625, %vm626
  %v628 = vsel %vm627, %v619, %v624
  %v629 = vpack.c.bf16 %v628, %v628
  %v630 = vunpack.c.l.bf16 %v629
  %v631 = vsub.f32 %v628, %v630
  %v632 = vpack.c.bf16 %v631, %v631
  %v634 = vsel %vm382, %v632, 0
  %636 = vmatpush.bf16.msra.mxu0 0
  %637 = vmatpush.bf16.msra.mxu0 0
  %638 = vmatpush.bf16.msra.mxu0 0
  %639 = vmatpush.bf16.msra.mxu0 0
  %640 = vmatpush.bf16.msra.mxu0 0
  %641 = vmatpush.bf16.msra.mxu0 0
  %642 = vmatpush.bf16.msra.mxu0 0
  %643 = vmatpush.bf16.msra.mxu0 %v387
  %644 = vmatmul.bf16.gmra.mxu0 %v634
  %v645 = vpop.f32.mrf.mxu0
  %v646 = vadd.f32 0.0, %v645
  %v647 = vpop.f32.mrf.mxu0
  %648 = vdwg.mxu0
  %649 = vmatpush.bf16.msra.mxu0 0
  %650 = vmatpush.bf16.msra.mxu0 0
  %651 = vmatpush.bf16.msra.mxu0 0
  %652 = vmatpush.bf16.msra.mxu0 0
  %653 = vmatpush.bf16.msra.mxu0 0
  %654 = vmatpush.bf16.msra.mxu0 0
  %655 = vmatpush.bf16.msra.mxu0 0
  %656 = vmatpush.bf16.msra.mxu0 %v390
  %657 = vmatmul.bf16.gmra.mxu0 %v634
  %v658 = vpop.f32.mrf.mxu0
  %v659 = vadd.f32 0.0, %v658
  %v660 = vpop.f32.mrf.mxu0
  %661 = vdwg.mxu0
  %662 = vmatpush.bf16.msra.mxu0 0
  %663 = vmatpush.bf16.msra.mxu0 0
  %664 = vmatpush.bf16.msra.mxu0 0
  %665 = vmatpush.bf16.msra.mxu0 0
  %666 = vmatpush.bf16.msra.mxu0 0
  %667 = vmatpush.bf16.msra.mxu0 0
  %668 = vmatpush.bf16.msra.mxu0 0
  %669 = vmatpush.bf16.msra.mxu0 %v393
  %670 = vmatmul.bf16.gmra.mxu0 %v634
  %v671 = vpop.f32.mrf.mxu0
  %v672 = vadd.f32 0.0, %v671
  %v673 = vpop.f32.mrf.mxu0
  %674 = vdwg.mxu0
  %v676 = vsel %vm382, %v629, 0
  %678 = vmatpush.bf16.msra.mxu0 0
  %679 = vmatpush.bf16.msra.mxu0 0
  %680 = vmatpush.bf16.msra.mxu0 0
  %681 = vmatpush.bf16.msra.mxu0 0
  %682 = vmatpush.bf16.msra.mxu0 0
  %683 = vmatpush.bf16.msra.mxu0 0
  %684 = vmatpush.bf16.msra.mxu0 0
  %685 = vmatpush.bf16.msra.mxu0 %v387
  %686 = vmatmul.bf16.gmra.mxu0 %v676
  %v687 = vpop.f32.mrf.mxu0
  %v688 = vadd.f32 %v646, %v687
  %v689 = vpop.f32.mrf.mxu0
  %690 = vdwg.mxu0
  %691 = vmatpush.bf16.msra.mxu0 0
  %692 = vmatpush.bf16.msra.mxu0 0
  %693 = vmatpush.bf16.msra.mxu0 0
  %694 = vmatpush.bf16.msra.mxu0 0
  %695 = vmatpush.bf16.msra.mxu0 0
  %696 = vmatpush.bf16.msra.mxu0 0
  %697 = vmatpush.bf16.msra.mxu0 0
  %698 = vmatpush.bf16.msra.mxu0 %v390
  %699 = vmatmul.bf16.gmra.mxu0 %v676
  %v700 = vpop.f32.mrf.mxu0
  %v701 = vadd.f32 %v659, %v700
  %v702 = vpop.f32.mrf.mxu0
  %703 = vdwg.mxu0
  %704 = vmatpush.bf16.msra.mxu0 0
  %705 = vmatpush.bf16.msra.mxu0 0
  %706 = vmatpush.bf16.msra.mxu0 0
  %707 = vmatpush.bf16.msra.mxu0 0
  %708 = vmatpush.bf16.msra.mxu0 0
  %709 = vmatpush.bf16.msra.mxu0 0
  %710 = vmatpush.bf16.msra.mxu0 0
  %711 = vmatpush.bf16.msra.mxu0 %v393
  %712 = vmatmul.bf16.gmra.mxu0 %v676
  %v713 = vpop.f32.mrf.mxu0
  %v714 = vadd.f32 %v672, %v713
  %v715 = vpop.f32.mrf.mxu0
  %716 = vdwg.mxu0
  %v717 = vperm.slane %v688, 0
  %v718 = vperm.slane %v701, 0
  %v719 = vperm.slane %v714, 0
  %v722 = vrot.slane %v718, 4
  %v723 = vsel %vm106, %v717, %v722
  %v725 = vmul.f32 %v484, %v723
  %v726 = vmul.f32 %v485, %v719
  %v727 = vld [vmem:[%s4] sm:$0xff]
  %v728 = vld [vmem:[%s4 + $0x8] sm:$0xf]
  %v729 = vmul.f32 %v725, %v727
  %v730 = vmul.f32 %v726, %v728
  %v731 = vld [vmem:[%s5] sm:$0xff]
  %v732 = vld [vmem:[%s5 + $0x8] sm:$0xf]
  %v733 = vadd.f32 %v729, %v731
  %v734 = vadd.f32 %v730, %v732
  %737 = vst [vmem:[#allocation1] ss:$2 sm:$0xff] %v733
  %s738 = scalar_lea.vmem [#allocation1], 16
  %739 = vst [vmem:[%s738] ss:$2 sm:$0xff] %v734
  %v740 = vld.sshfl [vmem:[#allocation1] sm:$0xff pattern:$0x75316420]
  %v741 = vld.sshfl [vmem:[#allocation1 + $0x8] sm:$0xff pattern:$0x75316420]
  %v742 = vld.sshfl [vmem:[#allocation1 + $0x10] sm:$0xff pattern:$0x75316420]
  %743 = vrot.lane.b32.xlu0 %v740, 7
  %v744 = vpop.permute.xlu0 %743
  %745 = vrot.lane.b32.xlu0 %v741, 7
  %v746 = vpop.permute.xlu0 %745
  %747 = vrot.lane.b32.xlu0 %v742, 7
  %v748 = vpop.permute.xlu0 %747
  %vm749 = vcmask 56320
  %v750 = vsel %vm749, %v744, %v746
  %v751 = vsel %vm749, %v746, %v748
  %v755 = vsel %vm749, 0.0, %v744
  %vm756 = vcmp.ge.f32.partialorder %v44, 7.0
  %vm757 = vcmp.le.f32.partialorder %v44, 54.0
  %vm758 = vmand %vm756, %vm757
  %v759 = vsel %vm758, 1, 0
  %v760 = vperm.slane %v759, 0
  %v761 = vperm.slane %v759, 1
  %v762 = vperm.slane %v759, 2
  %vm763 = vcmp.eq.s32.totalorder %v760, 1
  %vm764 = vcmp.eq.s32.totalorder %v761, 1
  %vm765 = vcmp.eq.s32.totalorder %v762, 1
  %v766 = vsel %vm763, %v755, 0.0
  %v767 = vsel %vm764, %v750, 0.0
  %v768 = vsel %vm765, %v751, 0.0
  %769 = vst [vmem:[#allocation1] ss:$2 sm:$0xff] %v733
  %s770 = scalar_lea.vmem [#allocation1], 16
  %771 = vst [vmem:[%s770] ss:$2 sm:$0xff] %v734
  %v772 = vld.sshfl [vmem:[#allocation1] sm:$0xff pattern:$0x75316420]
  %v773 = vld.sshfl [vmem:[#allocation1 + $0x8] sm:$0xff pattern:$0x75316420]
  %v774 = vld.sshfl [vmem:[#allocation1 + $0x10] sm:$0xff pattern:$0x75316420]
  %775 = vrot.lane.b32.xlu0 %v772, 6
  %v776 = vpop.permute.xlu0 %775
  %777 = vrot.lane.b32.xlu0 %v773, 6
  %v778 = vpop.permute.xlu0 %777
  %779 = vrot.lane.b32.xlu0 %v774, 6
  %v780 = vpop.permute.xlu0 %779
  %vm781 = vcmask 48128
  %v782 = vsel %vm781, %v776, %v778
  %v783 = vsel %vm781, %v778, %v780
  %v787 = vsel %vm781, 0.0, %v776
  %vm788 = vcmp.ge.f32.partialorder %v44, 6.0
  %vm789 = vcmp.le.f32.partialorder %v44, 53.0
  %vm790 = vmand %vm788, %vm789
  %v791 = vsel %vm790, 1, 0
  %v792 = vperm.slane %v791, 0
  %v793 = vperm.slane %v791, 1
  %v794 = vperm.slane %v791, 2
  %vm795 = vcmp.eq.s32.totalorder %v792, 1
  %vm796 = vcmp.eq.s32.totalorder %v793, 1
  %vm797 = vcmp.eq.s32.totalorder %v794, 1
  %v798 = vsel %vm795, %v787, 0.0
  %v799 = vsel %vm796, %v782, 0.0
  %v800 = vsel %vm797, %v783, 0.0
  %801 = vst [vmem:[#allocation1] ss:$2 sm:$0xff] %v733
  %s802 = scalar_lea.vmem [#allocation1], 16
  %803 = vst [vmem:[%s802] ss:$2 sm:$0xff] %v734
  %v804 = vld.sshfl [vmem:[#allocation1] sm:$0xff pattern:$0x75316420]
  %v805 = vld.sshfl [vmem:[#allocation1 + $0x8] sm:$0xff pattern:$0x75316420]
  %v806 = vld.sshfl [vmem:[#allocation1 + $0x10] sm:$0xff pattern:$0x75316420]
  %807 = vrot.lane.b32.xlu0 %v804, 5
  %v808 = vpop.permute.xlu0 %807
  %809 = vrot.lane.b32.xlu0 %v805, 5
  %v810 = vpop.permute.xlu0 %809
  %811 = vrot.lane.b32.xlu0 %v806, 5
  %v812 = vpop.permute.xlu0 %811
  %vm813 = vcmask 39936
  %v814 = vsel %vm813, %v808, %v810
  %v815 = vsel %vm813, %v810, %v812
  %v819 = vsel %vm813, 0.0, %v808
  %vm820 = vcmp.ge.f32.partialorder %v44, 5.0
  %vm821 = vcmp.le.f32.partialorder %v44, 52.0
  %vm822 = vmand %vm820, %vm821
  %v823 = vsel %vm822, 1, 0
  %v824 = vperm.slane %v823, 0
  %v825 = vperm.slane %v823, 1
  %v826 = vperm.slane %v823, 2
  %vm827 = vcmp.eq.s32.totalorder %v824, 1
  %vm828 = vcmp.eq.s32.totalorder %v825, 1
  %vm829 = vcmp.eq.s32.totalorder %v826, 1
  %v830 = vsel %vm827, %v819, 0.0
  %v831 = vsel %vm828, %v814, 0.0
  %v832 = vsel %vm829, %v815, 0.0
  %833 = vst [vmem:[#allocation1] ss:$2 sm:$0xff] %v733
  %s834 = scalar_lea.vmem [#allocation1], 16
  %835 = vst [vmem:[%s834] ss:$2 sm:$0xff] %v734
  %v836 = vld.sshfl [vmem:[#allocation1] sm:$0xff pattern:$0x75316420]
  %v837 = vld.sshfl [vmem:[#allocation1 + $0x8] sm:$0xff pattern:$0x75316420]
  %v838 = vld.sshfl [vmem:[#allocation1 + $0x10] sm:$0xff pattern:$0x75316420]
  %839 = vrot.lane.b32.xlu0 %v836, 4
  %v840 = vpop.permute.xlu0 %839
  %841 = vrot.lane.b32.xlu0 %v837, 4
  %v842 = vpop.permute.xlu0 %841
  %843 = vrot.lane.b32.xlu0 %v838, 4
  %v844 = vpop.permute.xlu0 %843
  %vm845 = vcmask 31744
  %v846 = vsel %vm845, %v840, %v842
  %v847 = vsel %vm845, %v842, %v844
  %v851 = vsel %vm845, 0.0, %v840
  %vm852 = vcmp.ge.f32.partialorder %v44, 4.0
  %vm853 = vcmp.le.f32.partialorder %v44, 51.0
  %vm854 = vmand %vm852, %vm853
  %v855 = vsel %vm854, 1, 0
  %v856 = vperm.slane %v855, 0
  %v857 = vperm.slane %v855, 1
  %v858 = vperm.slane %v855, 2
  %vm859 = vcmp.eq.s32.totalorder %v856, 1
  %vm860 = vcmp.eq.s32.totalorder %v857, 1
  %vm861 = vcmp.eq.s32.totalorder %v858, 1
  %v862 = vsel %vm859, %v851, 0.0
  %v863 = vsel %vm860, %v846, 0.0
  %v864 = vsel %vm861, %v847, 0.0
  %865 = vst [vmem:[#allocation1] ss:$2 sm:$0xff] %v733
  %s866 = scalar_lea.vmem [#allocation1], 16
  %867 = vst [vmem:[%s866] ss:$2 sm:$0xff] %v734
  %v868 = vld.sshfl [vmem:[#allocation1] sm:$0xff pattern:$0x75316420]
  %v869 = vld.sshfl [vmem:[#allocation1 + $0x8] sm:$0xff pattern:$0x75316420]
  %v870 = vld.sshfl [vmem:[#allocation1 + $0x10] sm:$0xff pattern:$0x75316420]
  %871 = vrot.lane.b32.xlu0 %v868, 3
  %v872 = vpop.permute.xlu0 %871
  %873 = vrot.lane.b32.xlu0 %v869, 3
  %v874 = vpop.permute.xlu0 %873
  %875 = vrot.lane.b32.xlu0 %v870, 3
  %v876 = vpop.permute.xlu0 %875
  %vm877 = vcmask 23552
  %v878 = vsel %vm877, %v872, %v874
  %v879 = vsel %vm877, %v874, %v876
  %v883 = vsel %vm877, 0.0, %v872
  %vm884 = vcmp.ge.f32.partialorder %v44, 3.0
  %vm885 = vcmp.le.f32.partialorder %v44, 50.0
  %vm886 = vmand %vm884, %vm885
  %v887 = vsel %vm886, 1, 0
  %v888 = vperm.slane %v887, 0
  %v889 = vperm.slane %v887, 1
  %v890 = vperm.slane %v887, 2
  %vm891 = vcmp.eq.s32.totalorder %v888, 1
  %vm892 = vcmp.eq.s32.totalorder %v889, 1
  %vm893 = vcmp.eq.s32.totalorder %v890, 1
  %v894 = vsel %vm891, %v883, 0.0
  %v895 = vsel %vm892, %v878, 0.0
  %v896 = vsel %vm893, %v879, 0.0
  %897 = vst [vmem:[#allocation1] ss:$2 sm:$0xff] %v733
  %s898 = scalar_lea.vmem [#allocation1], 16
  %899 = vst [vmem:[%s898] ss:$2 sm:$0xff] %v734
  %v900 = vld.sshfl [vmem:[#allocation1] sm:$0xff pattern:$0x75316420]
  %v901 = vld.sshfl [vmem:[#allocation1 + $0x8] sm:$0xff pattern:$0x75316420]
  %v902 = vld.sshfl [vmem:[#allocation1 + $0x10] sm:$0xff pattern:$0x75316420]
  %903 = vrot.lane.b32.xlu0 %v900, 2
  %v904 = vpop.permute.xlu0 %903
  %905 = vrot.lane.b32.xlu0 %v901, 2
  %v906 = vpop.permute.xlu0 %905
  %907 = vrot.lane.b32.xlu0 %v902, 2
  %v908 = vpop.permute.xlu0 %907
  %vm909 = vcmask 15360
  %v910 = vsel %vm909, %v904, %v906
  %v911 = vsel %vm909, %v906, %v908
  %v915 = vsel %vm909, 0.0, %v904
  %vm916 = vcmp.ge.f32.partialorder %v44, 2.0
  %vm917 = vcmp.le.f32.partialorder %v44, 49.0
  %vm918 = vmand %vm916, %vm917
  %v919 = vsel %vm918, 1, 0
  %v920 = vperm.slane %v919, 0
  %v921 = vperm.slane %v919, 1
  %v922 = vperm.slane %v919, 2
  %vm923 = vcmp.eq.s32.totalorder %v920, 1
  %vm924 = vcmp.eq.s32.totalorder %v921, 1
  %vm925 = vcmp.eq.s32.totalorder %v922, 1
  %v926 = vsel %vm923, %v915, 0.0
  %v927 = vsel %vm924, %v910, 0.0
  %v928 = vsel %vm925, %v911, 0.0
  %929 = vst [vmem:[#allocation1] ss:$2 sm:$0xff] %v733
  %s930 = scalar_lea.vmem [#allocation1], 16
  %931 = vst [vmem:[%s930] ss:$2 sm:$0xff] %v734
  %v932 = vld.sshfl [vmem:[#allocation1] sm:$0xff pattern:$0x75316420]
  %v933 = vld.sshfl [vmem:[#allocation1 + $0x8] sm:$0xff pattern:$0x75316420]
  %v934 = vld.sshfl [vmem:[#allocation1 + $0x10] sm:$0xff pattern:$0x75316420]
  %935 = vrot.lane.b32.xlu0 %v932, 1
  %v936 = vpop.permute.xlu0 %935
  %937 = vrot.lane.b32.xlu0 %v933, 1
  %v938 = vpop.permute.xlu0 %937
  %939 = vrot.lane.b32.xlu0 %v934, 1
  %v940 = vpop.permute.xlu0 %939
  %vm941 = vcmask 7168
  %v942 = vsel %vm941, %v936, %v938
  %v943 = vsel %vm941, %v938, %v940
  %v947 = vsel %vm941, 0.0, %v936
  %vm948 = vcmp.ge.f32.partialorder %v44, 1.0
  %vm949 = vcmp.le.f32.partialorder %v44, 48.0
  %vm950 = vmand %vm948, %vm949
  %v951 = vsel %vm950, 1, 0
  %v952 = vperm.slane %v951, 0
  %v953 = vperm.slane %v951, 1
  %v954 = vperm.slane %v951, 2
  %vm955 = vcmp.eq.s32.totalorder %v952, 1
  %vm956 = vcmp.eq.s32.totalorder %v953, 1
  %vm957 = vcmp.eq.s32.totalorder %v954, 1
  %v958 = vsel %vm955, %v947, 0.0
  %v959 = vsel %vm956, %v942, 0.0
  %v960 = vsel %vm957, %v943, 0.0
  %961 = vst [vmem:[#allocation1] ss:$2 sm:$0xff] %v733
  %s962 = scalar_lea.vmem [#allocation1], 16
  %963 = vst [vmem:[%s962] ss:$2 sm:$0xff] %v734
  %v964 = vld.sshfl [vmem:[#allocation1] sm:$0xff pattern:$0x75316420]
  %v965 = vld.sshfl [vmem:[#allocation1 + $0x8] sm:$0xff pattern:$0x75316420]
  %v966 = vld.sshfl [vmem:[#allocation1 + $0x10] sm:$0xff pattern:$0x75316420]
  %967 = vrot.lane.b32.xlu0 %v964, 127
  %v968 = vpop.permute.xlu0 %967
  %969 = vrot.lane.b32.xlu0 %v965, 127
  %v970 = vpop.permute.xlu0 %969
  %971 = vrot.lane.b32.xlu0 %v966, 127
  %v972 = vpop.permute.xlu0 %971
  %vm973 = vcmask 1039360
  %v974 = vsel %vm973, %v968, %v970
  %v975 = vsel %vm973, %v970, %v972
  %v979 = vsel %vm973, %v972, 0.0
  %vm980 = vcmp.ge.f32.partialorder %v44, -1.0
  %vm981 = vcmp.le.f32.partialorder %v44, 46.0
  %vm982 = vmand %vm980, %vm981
  %v983 = vsel %vm982, 1, 0
  %v984 = vperm.slane %v983, 0
  %v985 = vperm.slane %v983, 1
  %v986 = vperm.slane %v983, 2
  %vm987 = vcmp.eq.s32.totalorder %v984, 1
  %vm988 = vcmp.eq.s32.totalorder %v985, 1
  %vm989 = vcmp.eq.s32.totalorder %v986, 1
  %v990 = vsel %vm987, %v974, 0.0
  %v991 = vsel %vm988, %v975, 0.0
  %v992 = vsel %vm989, %v979, 0.0
  %993 = vst [vmem:[#allocation1] ss:$2 sm:$0xff] %v733
  %s994 = scalar_lea.vmem [#allocation1], 16
  %995 = vst [vmem:[%s994] ss:$2 sm:$0xff] %v734
  %v996 = vld.sshfl [vmem:[#allocation1] sm:$0xff pattern:$0x75316420]
  %v997 = vld.sshfl [vmem:[#allocation1 + $0x8] sm:$0xff pattern:$0x75316420]
  %v998 = vld.sshfl [vmem:[#allocation1 + $0x10] sm:$0xff pattern:$0x75316420]
  %999 = vrot.lane.b32.xlu0 %v996, 126
  %v1000 = vpop.permute.xlu0 %999
  %1001 = vrot.lane.b32.xlu0 %v997, 126
  %v1002 = vpop.permute.xlu0 %1001
  %1003 = vrot.lane.b32.xlu0 %v998, 126
  %v1004 = vpop.permute.xlu0 %1003
  %vm1005 = vcmask 1031168
  %v1006 = vsel %vm1005, %v1000, %v1002
  %v1007 = vsel %vm1005, %v1002, %v1004
  %v1011 = vsel %vm1005, %v1004, 0.0
  %vm1012 = vcmp.ge.f32.partialorder %v44, -2.0
  %vm1013 = vcmp.le.f32.partialorder %v44, 45.0
  %vm1014 = vmand %vm1012, %vm1013
  %v1015 = vsel %vm1014, 1, 0
  %v1016 = vperm.slane %v1015, 0
  %v1017 = vperm.slane %v1015, 1
  %v1018 = vperm.slane %v1015, 2
  %vm1019 = vcmp.eq.s32.totalorder %v1016, 1
  %vm1020 = vcmp.eq.s32.totalorder %v1017, 1
  %vm1021 = vcmp.eq.s32.totalorder %v1018, 1
  %v1022 = vsel %vm1019, %v1006, 0.0
  %v1023 = vsel %vm1020, %v1007, 0.0
  %v1024 = vsel %vm1021, %v1011, 0.0
  %1025 = vst [vmem:[#allocation1] ss:$2 sm:$0xff] %v733
  %s1026 = scalar_lea.vmem [#allocation1], 16
  %1027 = vst [vmem:[%s1026] ss:$2 sm:$0xff] %v734
  %v1028 = vld.sshfl [vmem:[#allocation1] sm:$0xff pattern:$0x75316420]
  %v1029 = vld.sshfl [vmem:[#allocation1 + $0x8] sm:$0xff pattern:$0x75316420]
  %v1030 = vld.sshfl [vmem:[#allocation1 + $0x10] sm:$0xff pattern:$0x75316420]
  %1031 = vrot.lane.b32.xlu0 %v1028, 125
  %v1032 = vpop.permute.xlu0 %1031
  %1033 = vrot.lane.b32.xlu0 %v1029, 125
  %v1034 = vpop.permute.xlu0 %1033
  %1035 = vrot.lane.b32.xlu0 %v1030, 125
  %v1036 = vpop.permute.xlu0 %1035
  %vm1037 = vcmask 1022976
  %v1038 = vsel %vm1037, %v1032, %v1034
  %v1039 = vsel %vm1037, %v1034, %v1036
  %v1043 = vsel %vm1037, %v1036, 0.0
  %vm1044 = vcmp.ge.f32.partialorder %v44, -3.0
  %vm1045 = vcmp.le.f32.partialorder %v44, 44.0
  %vm1046 = vmand %vm1044, %vm1045
  %v1047 = vsel %vm1046, 1, 0
  %v1048 = vperm.slane %v1047, 0
  %v1049 = vperm.slane %v1047, 1
  %v1050 = vperm.slane %v1047, 2
  %vm1051 = vcmp.eq.s32.totalorder %v1048, 1
  %vm1052 = vcmp.eq.s32.totalorder %v1049, 1
  %vm1053 = vcmp.eq.s32.totalorder %v1050, 1
  %v1054 = vsel %vm1051, %v1038, 0.0
  %v1055 = vsel %vm1052, %v1039, 0.0
  %v1056 = vsel %vm1053, %v1043, 0.0
  %1057 = vst [vmem:[#allocation1] ss:$2 sm:$0xff] %v733
  %s1058 = scalar_lea.vmem [#allocation1], 16
  %1059 = vst [vmem:[%s1058] ss:$2 sm:$0xff] %v734
  %v1060 = vld.sshfl [vmem:[#allocation1] sm:$0xff pattern:$0x75316420]
  %v1061 = vld.sshfl [vmem:[#allocation1 + $0x8] sm:$0xff pattern:$0x75316420]
  %v1062 = vld.sshfl [vmem:[#allocation1 + $0x10] sm:$0xff pattern:$0x75316420]
  %1063 = vrot.lane.b32.xlu0 %v1060, 124
  %v1064 = vpop.permute.xlu0 %1063
  %1065 = vrot.lane.b32.xlu0 %v1061, 124
  %v1066 = vpop.permute.xlu0 %1065
  %1067 = vrot.lane.b32.xlu0 %v1062, 124
  %v1068 = vpop.permute.xlu0 %1067
  %vm1069 = vcmask 1014784
  %v1070 = vsel %vm1069, %v1064, %v1066
  %v1071 = vsel %vm1069, %v1066, %v1068
  %v1075 = vsel %vm1069, %v1068, 0.0
  %vm1076 = vcmp.ge.f32.partialorder %v44, -4.0
  %vm1077 = vcmp.le.f32.partialorder %v44, 43.0
  %vm1078 = vmand %vm1076, %vm1077
  %v1079 = vsel %vm1078, 1, 0
  %v1080 = vperm.slane %v1079, 0
  %v1081 = vperm.slane %v1079, 1
  %v1082 = vperm.slane %v1079, 2
  %vm1083 = vcmp.eq.s32.totalorder %v1080, 1
  %vm1084 = vcmp.eq.s32.totalorder %v1081, 1
  %vm1085 = vcmp.eq.s32.totalorder %v1082, 1
  %v1086 = vsel %vm1083, %v1070, 0.0
  %v1087 = vsel %vm1084, %v1071, 0.0
  %v1088 = vsel %vm1085, %v1075, 0.0
  %1089 = vst [vmem:[#allocation1] ss:$2 sm:$0xff] %v733
  %s1090 = scalar_lea.vmem [#allocation1], 16
  %1091 = vst [vmem:[%s1090] ss:$2 sm:$0xff] %v734
  %v1092 = vld.sshfl [vmem:[#allocation1] sm:$0xff pattern:$0x75316420]
  %v1093 = vld.sshfl [vmem:[#allocation1 + $0x8] sm:$0xff pattern:$0x75316420]
  %v1094 = vld.sshfl [vmem:[#allocation1 + $0x10] sm:$0xff pattern:$0x75316420]
  %1095 = vrot.lane.b32.xlu0 %v1092, 123
  %v1096 = vpop.permute.xlu0 %1095
  %1097 = vrot.lane.b32.xlu0 %v1093, 123
  %v1098 = vpop.permute.xlu0 %1097
  %1099 = vrot.lane.b32.xlu0 %v1094, 123
  %v1100 = vpop.permute.xlu0 %1099
  %vm1101 = vcmask 1006592
  %v1102 = vsel %vm1101, %v1096, %v1098
  %v1103 = vsel %vm1101, %v1098, %v1100
  %v1107 = vsel %vm1101, %v1100, 0.0
  %vm1108 = vcmp.ge.f32.partialorder %v44, -5.0
  %vm1109 = vcmp.le.f32.partialorder %v44, 42.0
  %vm1110 = vmand %vm1108, %vm1109
  %v1111 = vsel %vm1110, 1, 0
  %v1112 = vperm.slane %v1111, 0
  %v1113 = vperm.slane %v1111, 1
  %v1114 = vperm.slane %v1111, 2
  %vm1115 = vcmp.eq.s32.totalorder %v1112, 1
  %vm1116 = vcmp.eq.s32.totalorder %v1113, 1
  %vm1117 = vcmp.eq.s32.totalorder %v1114, 1
  %v1118 = vsel %vm1115, %v1102, 0.0
  %v1119 = vsel %vm1116, %v1103, 0.0
  %v1120 = vsel %vm1117, %v1107, 0.0
  %1121 = vst [vmem:[#allocation1] ss:$2 sm:$0xff] %v733
  %s1122 = scalar_lea.vmem [#allocation1], 16
  %1123 = vst [vmem:[%s1122] ss:$2 sm:$0xff] %v734
  %v1124 = vld.sshfl [vmem:[#allocation1] sm:$0xff pattern:$0x75316420]
  %v1125 = vld.sshfl [vmem:[#allocation1 + $0x8] sm:$0xff pattern:$0x75316420]
  %v1126 = vld.sshfl [vmem:[#allocation1 + $0x10] sm:$0xff pattern:$0x75316420]
  %1127 = vrot.lane.b32.xlu0 %v1124, 122
  %v1128 = vpop.permute.xlu0 %1127
  %1129 = vrot.lane.b32.xlu0 %v1125, 122
  %v1130 = vpop.permute.xlu0 %1129
  %1131 = vrot.lane.b32.xlu0 %v1126, 122
  %v1132 = vpop.permute.xlu0 %1131
  %vm1133 = vcmask 998400
  %v1134 = vsel %vm1133, %v1128, %v1130
  %v1135 = vsel %vm1133, %v1130, %v1132
  %v1139 = vsel %vm1133, %v1132, 0.0
  %vm1140 = vcmp.ge.f32.partialorder %v44, -6.0
  %vm1141 = vcmp.le.f32.partialorder %v44, 41.0
  %vm1142 = vmand %vm1140, %vm1141
  %v1143 = vsel %vm1142, 1, 0
  %v1144 = vperm.slane %v1143, 0
  %v1145 = vperm.slane %v1143, 1
  %v1146 = vperm.slane %v1143, 2
  %vm1147 = vcmp.eq.s32.totalorder %v1144, 1
  %vm1148 = vcmp.eq.s32.totalorder %v1145, 1
  %vm1149 = vcmp.eq.s32.totalorder %v1146, 1
  %v1150 = vsel %vm1147, %v1134, 0.0
  %v1151 = vsel %vm1148, %v1135, 0.0
  %v1152 = vsel %vm1149, %v1139, 0.0
  %1153 = vst [vmem:[#allocation1] ss:$2 sm:$0xff] %v733
  %s1154 = scalar_lea.vmem [#allocation1], 16
  %1155 = vst [vmem:[%s1154] ss:$2 sm:$0xff] %v734
  %v1156 = vld.sshfl [vmem:[#allocation1] sm:$0xff pattern:$0x75316420]
  %v1157 = vld.sshfl [vmem:[#allocation1 + $0x8] sm:$0xff pattern:$0x75316420]
  %v1158 = vld.sshfl [vmem:[#allocation1 + $0x10] sm:$0xff pattern:$0x75316420]
  %1159 = vrot.lane.b32.xlu0 %v1156, 121
  %v1160 = vpop.permute.xlu0 %1159
  %1161 = vrot.lane.b32.xlu0 %v1157, 121
  %v1162 = vpop.permute.xlu0 %1161
  %1163 = vrot.lane.b32.xlu0 %v1158, 121
  %v1164 = vpop.permute.xlu0 %1163
  %vm1165 = vcmask 990208
  %v1166 = vsel %vm1165, %v1160, %v1162
  %v1167 = vsel %vm1165, %v1162, %v1164
  %v1171 = vsel %vm1165, %v1164, 0.0
  %vm1172 = vcmp.ge.f32.partialorder %v44, -7.0
  %vm1173 = vcmp.le.f32.partialorder %v44, 40.0
  %vm1174 = vmand %vm1172, %vm1173
  %v1175 = vsel %vm1174, 1, 0
  %v1176 = vperm.slane %v1175, 0
  %v1177 = vperm.slane %v1175, 1
  %v1178 = vperm.slane %v1175, 2
  %vm1179 = vcmp.eq.s32.totalorder %v1176, 1
  %vm1180 = vcmp.eq.s32.totalorder %v1177, 1
  %vm1181 = vcmp.eq.s32.totalorder %v1178, 1
  %v1182 = vsel %vm1179, %v1166, 0.0
  %v1183 = vsel %vm1180, %v1167, 0.0
  %v1184 = vsel %vm1181, %v1171, 0.0
  %v1188 = vrot.slane %v798, 4
  %v1189 = vrot.slane %v799, 4
  %v1190 = vrot.slane %v800, 4
  %v1197 = vrot.slane %v862, 4
  %v1198 = vrot.slane %v863, 4
  %v1199 = vrot.slane %v864, 4
  %v1206 = vrot.slane %v926, 4
  %v1207 = vrot.slane %v927, 4
  %v1208 = vrot.slane %v928, 4
  %s1212 = scalar_lea.vmem [#allocation1], 1
  %1213 = vst [vmem:[%s1212] ss:$2 sm:$0xff] %v733
  %s1214 = scalar_lea.vmem [#allocation1], 17
  %1215 = vst [vmem:[%s1214] ss:$2 sm:$0xff] %v734
  %v1216 = vld.sshfl [vmem:[#allocation1] sm:$0xff pattern:$0x75316420]
  %v1217 = vld.sshfl [vmem:[#allocation1 + $0x8] sm:$0xff pattern:$0x75316420]
  %v1218 = vld.sshfl [vmem:[#allocation1 + $0x10] sm:$0xff pattern:$0x75316420]
  %v1225 = vrot.slane %v1022, 4
  %v1226 = vrot.slane %v1023, 4
  %v1227 = vrot.slane %v1024, 4
  %v1234 = vrot.slane %v1086, 4
  %v1235 = vrot.slane %v1087, 4
  %v1236 = vrot.slane %v1088, 4
  %v1243 = vrot.slane %v1150, 4
  %v1244 = vrot.slane %v1151, 4
  %v1245 = vrot.slane %v1152, 4
  %v1249 = vsel %vm106, %v766, %v1188
  %v1250 = vsel %vm106, %v767, %v1189
  %v1251 = vsel %vm106, %v768, %v1190
  %v1252 = vsel %vm106, %v830, %v1197
  %v1253 = vsel %vm106, %v831, %v1198
  %v1254 = vsel %vm106, %v832, %v1199
  %v1255 = vsel %vm106, %v894, %v1206
  %v1256 = vsel %vm106, %v895, %v1207
  %v1257 = vsel %vm106, %v896, %v1208
  %v1258 = vsel %vm106, %v958, %v1216
  %v1259 = vsel %vm106, %v959, %v1217
  %v1260 = vsel %vm106, %v960, %v1218
  %v1261 = vsel %vm106, %v990, %v1225
  %v1262 = vsel %vm106, %v991, %v1226
  %v1263 = vsel %vm106, %v992, %v1227
  %v1264 = vsel %vm106, %v1054, %v1234
  %v1265 = vsel %vm106, %v1055, %v1235
  %v1266 = vsel %vm106, %v1056, %v1236
  %v1267 = vsel %vm106, %v1118, %v1243
  %v1268 = vsel %vm106, %v1119, %v1244
  %v1269 = vsel %vm106, %v1120, %v1245
  %v1270 = vsel %vm106, %v1182, 1.0
  %v1271 = vsel %vm106, %v1183, 1.0
  %v1272 = vsel %vm106, %v1184, 1.0
  %v1273 = vld [vmem:[%s6] sm:$0xf]
  %v1274 = vpack.c.bf16 %v1252, %v1249
  %v1275 = vpack.c.bf16 %v1253, %v1250
  %v1276 = vpack.c.bf16 %v1254, %v1251
  %v1277 = vpack.c.bf16 %v1258, %v1255
  %v1278 = vpack.c.bf16 %v1259, %v1256
  %v1279 = vpack.c.bf16 %v1260, %v1257
  %v1280 = vpack.c.bf16 %v1264, %v1261
  %v1281 = vpack.c.bf16 %v1265, %v1262
  %v1282 = vpack.c.bf16 %v1266, %v1263
  %v1283 = vpack.c.bf16 %v1270, %v1267
  %v1284 = vpack.c.bf16 %v1271, %v1268
  %v1285 = vpack.c.bf16 %v1272, %v1269
  %vm1286 = vcmask 498688
  %v1288 = vsel %vm1286, %v1273, 0
  %vm1290 = vcmask 1045504
  %vm1291 = vcmask 1046528
  %v1292 = vsel %vm1290, 4294967295, 65535
  %v1293 = vsel %vm1291, %v1292, 0
  %v1295 = vand.u32 %v1283, %v1293
  %v1298 = vand.u32 %v1284, %v1293
  %v1301 = vand.u32 %v1285, %v1293
  %1303 = vmatpush.bf16.msra.mxu0 0
  %1304 = vmatpush.bf16.msra.mxu0 0
  %1305 = vmatpush.bf16.msra.mxu0 0
  %1306 = vmatpush.bf16.msra.mxu0 0
  %1307 = vmatpush.bf16.msra.mxu0 %v1295
  %1308 = vmatpush.bf16.msra.mxu0 %v1280
  %1309 = vmatpush.bf16.msra.mxu0 %v1277
  %1310 = vmatpush.bf16.msra.mxu0 %v1274
  %1311 = vmatmul.bf16.gmra.mxu0 %v1288
  %v1312 = vpop.f32.mrf.mxu0
  %v1313 = vadd.f32 0.0, %v1312
  %v1314 = vpop.f32.mrf.mxu0
  %1315 = vdwg.mxu0
  %1316 = vmatpush.bf16.msra.mxu0 0
  %1317 = vmatpush.bf16.msra.mxu0 0
  %1318 = vmatpush.bf16.msra.mxu0 0
  %1319 = vmatpush.bf16.msra.mxu0 0
  %1320 = vmatpush.bf16.msra.mxu0 %v1298
  %1321 = vmatpush.bf16.msra.mxu0 %v1281
  %1322 = vmatpush.bf16.msra.mxu0 %v1278
  %1323 = vmatpush.bf16.msra.mxu0 %v1275
  %1324 = vmatmul.bf16.gmra.mxu0 %v1288
  %v1325 = vpop.f32.mrf.mxu0
  %v1326 = vadd.f32 0.0, %v1325
  %v1327 = vpop.f32.mrf.mxu0
  %1328 = vdwg.mxu0
  %1329 = vmatpush.bf16.msra.mxu0 0
  %1330 = vmatpush.bf16.msra.mxu0 0
  %1331 = vmatpush.bf16.msra.mxu0 0
  %1332 = vmatpush.bf16.msra.mxu0 0
  %1333 = vmatpush.bf16.msra.mxu0 %v1301
  %1334 = vmatpush.bf16.msra.mxu0 %v1282
  %1335 = vmatpush.bf16.msra.mxu0 %v1279
  %1336 = vmatpush.bf16.msra.mxu0 %v1276
  %1337 = vmatmul.bf16.gmra.mxu0 %v1288
  %v1338 = vpop.f32.mrf.mxu0
  %v1339 = vadd.f32 0.0, %v1338
  %v1340 = vpop.f32.mrf.mxu0
  %1341 = vdwg.mxu0
  %vm1342 = vcmp.gt.f32.partialorder %v1313, 0.0
  %vm1343 = vcmp.gt.f32.partialorder %v1326, 0.0
  %vm1344 = vcmp.gt.f32.partialorder %v1339, 0.0
  %v1345 = vmul.f32 %v1313, 0.3
  %v1346 = vmul.f32 %v1326, 0.3
  %v1347 = vmul.f32 %v1339, 0.3
  %v1348 = vsel %vm1342, %v1313, %v1345
  %v1349 = vsel %vm1343, %v1326, %v1346
  %v1350 = vsel %vm1344, %v1339, %v1347
  %1354 = vrot.lane.b32.xlu0 %v1348, 127
  %v1355 = vpop.permute.xlu0 %1354
  %1356 = vrot.lane.b32.xlu0 %v1349, 127
  %v1357 = vpop.permute.xlu0 %1356
  %1358 = vrot.lane.b32.xlu0 %v1350, 127
  %v1359 = vpop.permute.xlu0 %1358
  %v1360 = vsel %vm973, %v1355, %v1357
  %v1361 = vsel %vm973, %v1357, %v1359
  %v1365 = vsel %vm973, %v1359, 0.0
  %1366 = vrot.lane.b32.xlu0 %v1348, 126
  %v1367 = vpop.permute.xlu0 %1366
  %1368 = vrot.lane.b32.xlu0 %v1349, 126
  %v1369 = vpop.permute.xlu0 %1368
  %1370 = vrot.lane.b32.xlu0 %v1350, 126
  %v1371 = vpop.permute.xlu0 %1370
  %v1372 = vsel %vm1005, %v1367, %v1369
  %v1373 = vsel %vm1005, %v1369, %v1371
  %v1377 = vsel %vm1005, %v1371, 0.0
  %v1378 = vld [vmem:[%s7] sm:$0xf]
  %v1379 = vpack.c.bf16 %v1360, %v1348
  %v1380 = vpack.c.bf16 %v1361, %v1349
  %v1381 = vpack.c.bf16 %v1365, %v1350
  %v1382 = vpack.c.bf16 1.0, %v1372
  %v1383 = vpack.c.bf16 1.0, %v1373
  %v1384 = vpack.c.bf16 1.0, %v1377
  %vm1385 = vcmask 203776
  %v1387 = vsel %vm1385, %v1378, 0
  %vm1389 = vcmask 1044480
  %v1390 = vsel %vm106, 4294967295, 65535
  %v1391 = vsel %vm1389, %v1390, 0
  %v1393 = vand.u32 %v1382, %v1391
  %v1396 = vand.u32 %v1383, %v1391
  %v1399 = vand.u32 %v1384, %v1391
  %1401 = vmatpush.bf16.msra.mxu0 0
  %1402 = vmatpush.bf16.msra.mxu0 0
  %1403 = vmatpush.bf16.msra.mxu0 0
  %1404 = vmatpush.bf16.msra.mxu0 0
  %1405 = vmatpush.bf16.msra.mxu0 0
  %1406 = vmatpush.bf16.msra.mxu0 0
  %1407 = vmatpush.bf16.msra.mxu0 %v1393
  %1408 = vmatpush.bf16.msra.mxu0 %v1379
  %1409 = vmatmul.bf16.gmra.mxu0 %v1387
  %v1410 = vpop.f32.mrf.mxu0
  %v1411 = vadd.f32 0.0, %v1410
  %v1412 = vpop.f32.mrf.mxu0
  %1413 = vdwg.mxu0
  %1414 = vmatpush.bf16.msra.mxu0 0
  %1415 = vmatpush.bf16.msra.mxu0 0
  %1416 = vmatpush.bf16.msra.mxu0 0
  %1417 = vmatpush.bf16.msra.mxu0 0
  %1418 = vmatpush.bf16.msra.mxu0 0
  %1419 = vmatpush.bf16.msra.mxu0 0
  %1420 = vmatpush.bf16.msra.mxu0 %v1396
  %1421 = vmatpush.bf16.msra.mxu0 %v1380
  %1422 = vmatmul.bf16.gmra.mxu0 %v1387
  %v1423 = vpop.f32.mrf.mxu0
  %v1424 = vadd.f32 0.0, %v1423
  %v1425 = vpop.f32.mrf.mxu0
  %1426 = vdwg.mxu0
  %1427 = vmatpush.bf16.msra.mxu0 0
  %1428 = vmatpush.bf16.msra.mxu0 0
  %1429 = vmatpush.bf16.msra.mxu0 0
  %1430 = vmatpush.bf16.msra.mxu0 0
  %1431 = vmatpush.bf16.msra.mxu0 0
  %1432 = vmatpush.bf16.msra.mxu0 0
  %1433 = vmatpush.bf16.msra.mxu0 %v1399
  %1434 = vmatpush.bf16.msra.mxu0 %v1381
  %1435 = vmatmul.bf16.gmra.mxu0 %v1387
  %v1436 = vpop.f32.mrf.mxu0
  %v1437 = vadd.f32 0.0, %v1436
  %v1438 = vpop.f32.mrf.mxu0
  %1439 = vdwg.mxu0
  %vm1440 = vcmp.gt.f32.partialorder %v1411, 0.0
  %vm1441 = vcmp.gt.f32.partialorder %v1424, 0.0
  %vm1442 = vcmp.gt.f32.partialorder %v1437, 0.0
  %v1443 = vmul.f32 %v1411, 0.3
  %v1444 = vmul.f32 %v1424, 0.3
  %v1445 = vmul.f32 %v1437, 0.3
  %v1446 = vsel %vm1440, %v1411, %v1443
  %v1447 = vsel %vm1441, %v1424, %v1444
  %v1448 = vsel %vm1442, %v1437, %v1445
  %v1449 = vld [vmem:[%s8] sm:$0x3]
  %v1450 = vpack.c.bf16 1.0, %v1446
  %v1451 = vpack.c.bf16 1.0, %v1447
  %v1452 = vpack.c.bf16 1.0, %v1448
  %vm1453 = vcmask 72704
  %v1455 = vsel %vm1453, %v1449, 0
  %v1458 = vand.u32 %v1450, %v1391
  %v1461 = vand.u32 %v1451, %v1391
  %v1464 = vand.u32 %v1452, %v1391
  %1466 = vmatpush.bf16.msra.mxu0 0
  %1467 = vmatpush.bf16.msra.mxu0 0
  %1468 = vmatpush.bf16.msra.mxu0 0
  %1469 = vmatpush.bf16.msra.mxu0 0
  %1470 = vmatpush.bf16.msra.mxu0 0
  %1471 = vmatpush.bf16.msra.mxu0 0
  %1472 = vmatpush.bf16.msra.mxu0 0
  %1473 = vmatpush.bf16.msra.mxu0 %v1458
  %1474 = vmatmul.bf16.gmra.mxu0 %v1455
  %v1475 = vpop.f32.mrf.mxu0
  %v1476 = vadd.f32 0.0, %v1475
  %v1477 = vpop.f32.mrf.mxu0
  %1478 = vdwg.mxu0
  %1479 = vmatpush.bf16.msra.mxu0 0
  %1480 = vmatpush.bf16.msra.mxu0 0
  %1481 = vmatpush.bf16.msra.mxu0 0
  %1482 = vmatpush.bf16.msra.mxu0 0
  %1483 = vmatpush.bf16.msra.mxu0 0
  %1484 = vmatpush.bf16.msra.mxu0 0
  %1485 = vmatpush.bf16.msra.mxu0 0
  %1486 = vmatpush.bf16.msra.mxu0 %v1461
  %1487 = vmatmul.bf16.gmra.mxu0 %v1455
  %v1488 = vpop.f32.mrf.mxu0
  %v1489 = vadd.f32 0.0, %v1488
  %v1490 = vpop.f32.mrf.mxu0
  %1491 = vdwg.mxu0
  %1492 = vmatpush.bf16.msra.mxu0 0
  %1493 = vmatpush.bf16.msra.mxu0 0
  %1494 = vmatpush.bf16.msra.mxu0 0
  %1495 = vmatpush.bf16.msra.mxu0 0
  %1496 = vmatpush.bf16.msra.mxu0 0
  %1497 = vmatpush.bf16.msra.mxu0 0
  %1498 = vmatpush.bf16.msra.mxu0 0
  %1499 = vmatpush.bf16.msra.mxu0 %v1464
  %1500 = vmatmul.bf16.gmra.mxu0 %v1455
  %v1501 = vpop.f32.mrf.mxu0
  %v1502 = vadd.f32 0.0, %v1501
  %v1503 = vpop.f32.mrf.mxu0
  %1504 = vdwg.mxu0
  %vm1505 = vcmp.gt.f32.partialorder %v1476, 0.0
  %vm1506 = vcmp.gt.f32.partialorder %v1489, 0.0
  %vm1507 = vcmp.gt.f32.partialorder %v1502, 0.0
  %v1508 = vmul.f32 %v1476, 0.3
  %v1509 = vmul.f32 %v1489, 0.3
  %v1510 = vmul.f32 %v1502, 0.3
  %v1511 = vsel %vm1505, %v1476, %v1508
  %v1512 = vsel %vm1506, %v1489, %v1509
  %v1513 = vsel %vm1507, %v1502, %v1510
  %v1514 = vld [vmem:[%s9] sm:$0x1]
  %v1515 = vsel %vm106, %v1511, 1.0
  %v1516 = vsel %vm106, %v1512, 1.0
  %v1517 = vsel %vm106, %v1513, 1.0
  %v1518 = vpack.c.bf16 %v1515, %v1515
  %v1519 = vpack.c.bf16 %v1516, %v1516
  %v1520 = vpack.c.bf16 %v1517, %v1517
  %v1522 = vsel %vm813, %v1514, 0
  %vm1524 = vcmask 1041408
  %vm1525 = vcmask 1042432
  %v1526 = vsel %vm1524, 4294967295, 65535
  %v1527 = vsel %vm1525, %v1526, 0
  %v1529 = vand.u32 %v1518, %v1527
  %v1532 = vand.u32 %v1519, %v1527
  %v1535 = vand.u32 %v1520, %v1527
  %1537 = vmatpush.bf16.msra.mxu0 0
  %1538 = vmatpush.bf16.msra.mxu0 0
  %1539 = vmatpush.bf16.msra.mxu0 0
  %1540 = vmatpush.bf16.msra.mxu0 0
  %1541 = vmatpush.bf16.msra.mxu0 0
  %1542 = vmatpush.bf16.msra.mxu0 0
  %1543 = vmatpush.bf16.msra.mxu0 0
  %1544 = vmatpush.bf16.msra.mxu0 %v1529
  %1545 = vmatmul.bf16.gmra.mxu0 %v1522
  %v1546 = vpop.f32.mrf.mxu0
  %v1547 = vadd.f32 0.0, %v1546
  %v1548 = vpop.f32.mrf.mxu0
  %1549 = vdwg.mxu0
  %1550 = vmatpush.bf16.msra.mxu0 0
  %1551 = vmatpush.bf16.msra.mxu0 0
  %1552 = vmatpush.bf16.msra.mxu0 0
  %1553 = vmatpush.bf16.msra.mxu0 0
  %1554 = vmatpush.bf16.msra.mxu0 0
  %1555 = vmatpush.bf16.msra.mxu0 0
  %1556 = vmatpush.bf16.msra.mxu0 0
  %1557 = vmatpush.bf16.msra.mxu0 %v1532
  %1558 = vmatmul.bf16.gmra.mxu0 %v1522
  %v1559 = vpop.f32.mrf.mxu0
  %v1560 = vadd.f32 0.0, %v1559
  %v1561 = vpop.f32.mrf.mxu0
  %1562 = vdwg.mxu0
  %1563 = vmatpush.bf16.msra.mxu0 0
  %1564 = vmatpush.bf16.msra.mxu0 0
  %1565 = vmatpush.bf16.msra.mxu0 0
  %1566 = vmatpush.bf16.msra.mxu0 0
  %1567 = vmatpush.bf16.msra.mxu0 0
  %1568 = vmatpush.bf16.msra.mxu0 0
  %1569 = vmatpush.bf16.msra.mxu0 0
  %1570 = vmatpush.bf16.msra.mxu0 %v1535
  %1571 = vmatmul.bf16.gmra.mxu0 %v1522
  %v1572 = vpop.f32.mrf.mxu0
  %v1573 = vadd.f32 0.0, %v1572
  %v1574 = vpop.f32.mrf.mxu0
  %1575 = vdwg.mxu0
  %vm1576 = vcmp.gt.f32.partialorder %v1547, 0.0
  %vm1577 = vcmp.gt.f32.partialorder %v1560, 0.0
  %vm1578 = vcmp.gt.f32.partialorder %v1573, 0.0
  %v1579 = vmul.f32 %v1547, 0.3
  %v1580 = vmul.f32 %v1560, 0.3
  %v1581 = vmul.f32 %v1573, 0.3
  %v1582 = vsel %vm1576, %v1547, %v1579
  %v1583 = vsel %vm1577, %v1560, %v1580
  %v1584 = vsel %vm1578, %v1573, %v1581
  %v1585 = vld [vmem:[%s10] sm:$0xff]
  %v1586 = vld [vmem:[%s10 + $0x8] sm:$0xff]
  %v1587 = vld [vmem:[%s10 + $0x10] sm:$0xff]
  %v1588 = vld [vmem:[%s10 + $0x18] sm:$0xff]
  %v1589 = vld [vmem:[%s10 + $0x20] sm:$0xff]
  %v1590 = vld [vmem:[%s10 + $0x28] sm:$0xff]
  %v1591 = vld [vmem:[%s10 + $0x30] sm:$0xff]
  %v1592 = vld [vmem:[%s10 + $0x38] sm:$0xff]
  %v1593 = vld [vmem:[%s10 + $0x40] sm:$0xff]
  %v1594 = vld [vmem:[%s10 + $0x48] sm:$0xff]
  %v1595 = vld [vmem:[%s10 + $0x50] sm:$0xff]
  %v1596 = vld [vmem:[%s10 + $0x58] sm:$0xff]
  %v1597 = vperm.slane %v1582, 0
  %v1598 = vperm.slane %v1583, 0
  %v1599 = vperm.slane %v1584, 0
  %v1600 = vmul.f32 %v1585, %v1597
  %v1601 = vmul.f32 %v1586, %v1598
  %v1602 = vmul.f32 %v1587, %v1599
  %v1603 = vmul.f32 %v1588, %v1597
  %v1604 = vmul.f32 %v1589, %v1598
  %v1605 = vmul.f32 %v1590, %v1599
  %v1606 = vmul.f32 %v1591, %v1597
  %v1607 = vmul.f32 %v1592, %v1598
  %v1608 = vmul.f32 %v1593, %v1599
  %v1609 = vmul.f32 %v1594, %v1597
  %v1610 = vmul.f32 %v1595, %v1598
  %v1611 = vmul.f32 %v1596, %v1599
  %v1612 = vpack.c.bf16 %v1601, %v1600
  %v1613 = vpack.c.bf16 %v1602, %v1602
  %v1614 = vpack.c.bf16 %v1604, %v1603
  %v1615 = vpack.c.bf16 %v1605, %v1605
  %v1616 = vpack.c.bf16 %v1607, %v1606
  %v1617 = vpack.c.bf16 %v1608, %v1608
  %v1618 = vpack.c.bf16 %v1610, %v1609
  %v1619 = vpack.c.bf16 %v1611, %v1611
  %v1620 = vunpack.c.l.bf16 %v1612
  %v1621 = vunpack.c.h.bf16 %v1612
  %v1622 = vunpack.c.l.bf16 %v1613
  %v1623 = vunpack.c.l.bf16 %v1614
  %v1624 = vunpack.c.h.bf16 %v1614
  %v1625 = vunpack.c.l.bf16 %v1615
  %v1626 = vunpack.c.l.bf16 %v1616
  %v1627 = vunpack.c.h.bf16 %v1616
  %v1628 = vunpack.c.l.bf16 %v1617
  %v1629 = vunpack.c.l.bf16 %v1618
  %v1630 = vunpack.c.h.bf16 %v1618
  %v1631 = vunpack.c.l.bf16 %v1619
  %v1632 = vsub.f32 %v1600, %v1620
  %v1633 = vsub.f32 %v1601, %v1621
  %v1634 = vsub.f32 %v1602, %v1622
  %v1635 = vsub.f32 %v1603, %v1623
  %v1636 = vsub.f32 %v1604, %v1624
  %v1637 = vsub.f32 %v1605, %v1625
  %v1638 = vsub.f32 %v1606, %v1626
  %v1639 = vsub.f32 %v1607, %v1627
  %v1640 = vsub.f32 %v1608, %v1628
  %v1641 = vsub.f32 %v1609, %v1629
  %v1642 = vsub.f32 %v1610, %v1630
  %v1643 = vsub.f32 %v1611, %v1631
  %v1644 = vpack.c.bf16 %v1635, %v1632
  %v1645 = vpack.c.bf16 %v1636, %v1633
  %v1646 = vpack.c.bf16 %v1637, %v1634
  %v1647 = vpack.c.bf16 %v1641, %v1638
  %v1648 = vpack.c.bf16 %v1642, %v1639
  %v1649 = vpack.c.bf16 %v1643, %v1640
  %1650 = vmatpush.bf16.msra.mxu0 %v242
  %1651 = vmatpush.bf16.msra.mxu0 %v241
  %1652 = vmatpush.bf16.msra.mxu0 %v240
  %1653 = vmatpush.bf16.msra.mxu0 %v239
  %1654 = vmatpush.bf16.msra.mxu0 %v238
  %1655 = vmatpush.bf16.msra.mxu0 %v237
  %1656 = vmatpush.bf16.msra.mxu0 %v236
  %1657 = vmatpush.bf16.msra.mxu0 %v235
  %1658 = vmatmul.bf16.gmra.mxu0 %v1644
  %v1659 = vpop.f32.mrf.mxu0
  %v1660 = vadd.f32 0.0, %v1659
  %v1661 = vpop.f32.mrf.mxu0
  %v1662 = vadd.f32 0.0, %v1661
  %1663 = vmatmul.bf16.gmra.mxu0 %v1647
  %v1664 = vpop.f32.mrf.mxu0
  %v1665 = vadd.f32 0.0, %v1664
  %v1666 = vpop.f32.mrf.mxu0
  %v1667 = vadd.f32 0.0, %v1666
  %1668 = vdwg.mxu0
  %1669 = vmatpush.bf16.msra.mxu0 %v250
  %1670 = vmatpush.bf16.msra.mxu0 %v249
  %1671 = vmatpush.bf16.msra.mxu0 %v248
  %1672 = vmatpush.bf16.msra.mxu0 %v247
  %1673 = vmatpush.bf16.msra.mxu0 %v246
  %1674 = vmatpush.bf16.msra.mxu0 %v245
  %1675 = vmatpush.bf16.msra.mxu0 %v244
  %1676 = vmatpush.bf16.msra.mxu0 %v243
  %1677 = vmatmul.bf16.gmra.mxu0 %v1645
  %v1678 = vpop.f32.mrf.mxu0
  %v1679 = vadd.f32 %v1660, %v1678
  %v1680 = vpop.f32.mrf.mxu0
  %v1681 = vadd.f32 %v1662, %v1680
  %1682 = vmatmul.bf16.gmra.mxu0 %v1648
  %v1683 = vpop.f32.mrf.mxu0
  %v1684 = vadd.f32 %v1665, %v1683
  %v1685 = vpop.f32.mrf.mxu0
  %v1686 = vadd.f32 %v1667, %v1685
  %1687 = vdwg.mxu0
  %1688 = vmatpush.bf16.msra.mxu0 %v258
  %1689 = vmatpush.bf16.msra.mxu0 %v257
  %1690 = vmatpush.bf16.msra.mxu0 %v256
  %1691 = vmatpush.bf16.msra.mxu0 %v255
  %1692 = vmatpush.bf16.msra.mxu0 %v254
  %1693 = vmatpush.bf16.msra.mxu0 %v253
  %1694 = vmatpush.bf16.msra.mxu0 %v252
  %1695 = vmatpush.bf16.msra.mxu0 %v251
  %1696 = vmatmul.bf16.gmra.mxu0 %v1646
  %v1697 = vpop.f32.mrf.mxu0
  %v1698 = vadd.f32 %v1679, %v1697
  %v1699 = vpop.f32.mrf.mxu0
  %v1700 = vadd.f32 %v1681, %v1699
  %1701 = vmatmul.bf16.gmra.mxu0 %v1649
  %v1702 = vpop.f32.mrf.mxu0
  %v1703 = vadd.f32 %v1684, %v1702
  %v1704 = vpop.f32.mrf.mxu0
  %v1705 = vadd.f32 %v1686, %v1704
  %1706 = vdwg.mxu0
  %v1715 = vunpack.c.l.b16 %v1612
  %v1716 = vunpack.c.h.b16 %v1612
  %v1717 = vunpack.c.l.b16 %v1613
  %v1718 = vunpack.c.l.b16 %v1614
  %v1719 = vunpack.c.h.b16 %v1614
  %v1720 = vunpack.c.l.b16 %v1615
  %v1721 = vunpack.c.l.b16 %v1616
  %v1722 = vunpack.c.h.b16 %v1616
  %v1723 = vunpack.c.l.b16 %v1617
  %v1724 = vunpack.c.l.b16 %v1618
  %v1725 = vunpack.c.h.b16 %v1618
  %v1726 = vunpack.c.l.b16 %v1619
  %v1727 = vpack.c.b16 %v1718, %v1715
  %v1728 = vpack.c.b16 %v1719, %v1716
  %v1729 = vpack.c.b16 %v1720, %v1717
  %v1730 = vpack.c.b16 %v1724, %v1721
  %v1731 = vpack.c.b16 %v1725, %v1722
  %v1732 = vpack.c.b16 %v1726, %v1723
  %1739 = vmatpush.bf16.msra.mxu0 %v242
  %1740 = vmatpush.bf16.msra.mxu0 %v241
  %1741 = vmatpush.bf16.msra.mxu0 %v240
  %1742 = vmatpush.bf16.msra.mxu0 %v239
  %1743 = vmatpush.bf16.msra.mxu0 %v238
  %1744 = vmatpush.bf16.msra.mxu0 %v237
  %1745 = vmatpush.bf16.msra.mxu0 %v236
  %1746 = vmatpush.bf16.msra.mxu0 %v235
  %1747 = vmatmul.bf16.gmra.mxu0 %v1727
  %v1748 = vpop.f32.mrf.mxu0
  %v1749 = vadd.f32 %v1698, %v1748
  %v1750 = vpop.f32.mrf.mxu0
  %v1751 = vadd.f32 %v1700, %v1750
  %1752 = vmatmul.bf16.gmra.mxu0 %v1730
  %v1753 = vpop.f32.mrf.mxu0
  %v1754 = vadd.f32 %v1703, %v1753
  %v1755 = vpop.f32.mrf.mxu0
  %v1756 = vadd.f32 %v1705, %v1755
  %1757 = vdwg.mxu0
  %1758 = vmatpush.bf16.msra.mxu0 %v250
  %1759 = vmatpush.bf16.msra.mxu0 %v249
  %1760 = vmatpush.bf16.msra.mxu0 %v248
  %1761 = vmatpush.bf16.msra.mxu0 %v247
  %1762 = vmatpush.bf16.msra.mxu0 %v246
  %1763 = vmatpush.bf16.msra.mxu0 %v245
  %1764 = vmatpush.bf16.msra.mxu0 %v244
  %1765 = vmatpush.bf16.msra.mxu0 %v243
  %1766 = vmatmul.bf16.gmra.mxu0 %v1728
  %v1767 = vpop.f32.mrf.mxu0
  %v1768 = vadd.f32 %v1749, %v1767
  %v1769 = vpop.f32.mrf.mxu0
  %v1770 = vadd.f32 %v1751, %v1769
  %1771 = vmatmul.bf16.gmra.mxu0 %v1731
  %v1772 = vpop.f32.mrf.mxu0
  %v1773 = vadd.f32 %v1754, %v1772
  %v1774 = vpop.f32.mrf.mxu0
  %v1775 = vadd.f32 %v1756, %v1774
  %1776 = vdwg.mxu0
  %1777 = vmatpush.bf16.msra.mxu0 %v258
  %1778 = vmatpush.bf16.msra.mxu0 %v257
  %1779 = vmatpush.bf16.msra.mxu0 %v256
  %1780 = vmatpush.bf16.msra.mxu0 %v255
  %1781 = vmatpush.bf16.msra.mxu0 %v254
  %1782 = vmatpush.bf16.msra.mxu0 %v253
  %1783 = vmatpush.bf16.msra.mxu0 %v252
  %1784 = vmatpush.bf16.msra.mxu0 %v251
  %1785 = vmatmul.bf16.gmra.mxu0 %v1729
  %v1786 = vpop.f32.mrf.mxu0
  %v1787 = vadd.f32 %v1768, %v1786
  %v1788 = vpop.f32.mrf.mxu0
  %v1789 = vadd.f32 %v1770, %v1788
  %1790 = vmatmul.bf16.gmra.mxu0 %v1732
  %v1791 = vpop.f32.mrf.mxu0
  %v1792 = vadd.f32 %v1773, %v1791
  %v1793 = vpop.f32.mrf.mxu0
  %v1794 = vadd.f32 %v1775, %v1793
  %1795 = vdwg.mxu0
  %v1796 = vld [vmem:[%s11] sm:$0xff]
  %v1797 = vld [vmem:[%s11 + $0x8] sm:$0xff]
  %v1798 = vld [vmem:[%s11 + $0x10] sm:$0xff]
  %v1799 = vld [vmem:[%s11 + $0x18] sm:$0xff]
  %1801 = vset.pattern.permute.xlu0 0
  %1802 = vperm.xlu0 %1801, %v1796
  %v1803 = vpop.permute.xlu0 %1802
  %1806 = vset.pattern.permute.xlu0 0
  %1807 = vperm.xlu0 %1806, %v1797
  %v1808 = vpop.permute.xlu0 %1807
  %1811 = vset.pattern.permute.xlu0 0
  %1812 = vperm.xlu0 %1811, %v1798
  %v1813 = vpop.permute.xlu0 %1812
  %1816 = vset.pattern.permute.xlu0 0
  %1817 = vperm.xlu0 %1816, %v1799
  %v1818 = vpop.permute.xlu0 %1817
  %v1820 = vadd.f32 %v1787, %v1803
  %v1821 = vadd.f32 %v1789, %v1808
  %v1822 = vadd.f32 %v1792, %v1813
  %v1823 = vadd.f32 %v1794, %v1818
  %1824 = vst.msk [vmem:[%s12] sm:$0xff] %vm382, %v1820
  %1825 = vst.msk [vmem:[%s12 + $0x8] sm:$0xff] %vm382, %v1821
  %1826 = vst.msk [vmem:[%s12 + $0x10] sm:$0xff] %vm382, %v1822
  %1827 = vst.msk [vmem:[%s12 + $0x18] sm:$0xff] %vm382, %v1823
  // Predicated region
  $region50: #{tpu_custom_call.1} parent=0 // pred_check
    _
  $region51: #{tpu_custom_call.1} parent=0 // pred_check_branch
    %1829 = sbr.rel (0) target = $region53
  $region52: #{tpu_custom_call.1} parent=0 // pred_region
    _
  $region53: #{tpu_custom_call.1} parent=0 // pred_fallthru
    _
  // Predicated region
  $region54: #{tpu_custom_call.1} parent=0 // pred_check
    _
  $region55: #{tpu_custom_call.1} parent=0 // pred_check_branch
    %1831 = sbr.rel (0) target = $region57
  $region56: #{tpu_custom_call.1} parent=0 // pred_region
    _
  $region57: #{tpu_custom_call.1} parent=0 // pred_fallthru
    _

</llo_original>
